<compile_context>
chip_gen: v7x
topology: tpu7x:2x2x1
jax: 0.10.0
libtpu: 0.0.40
codegen_flags: <defaults>
</compile_context>

<pallas_src>
import functools
import math

import jax
import jax.numpy as jnp
from jax.experimental import pallas as pl
from jax.experimental.pallas import tpu as pltpu


# --------------------- kernel 1: fused QKV projection + RoPE ---------------------
def qkv_rope_kernel(x_ref, wq_ref, wk_ref, wv_ref, cos_ref, sin_ref,
                    q_ref, k_ref, v_ref,
                    *, num_heads, num_kv_heads, head_dim):
    x = x_ref[0]                                                      # (Ts, H) bf16

    q = jnp.dot(x, wq_ref[...], preferred_element_type=jnp.float32)  # (Ts, H)   f32
    k = jnp.dot(x, wk_ref[...], preferred_element_type=jnp.float32)  # (Ts, Hkv) f32
    v = jnp.dot(x, wv_ref[...], preferred_element_type=jnp.float32)  # (Ts, Hkv) f32

    cos = cos_ref[...]                 # (Ts, hd) f32
    sin_s = sin_ref[...]               # (Ts, hd) f32, rotate_half sign pre-folded
    half = head_dim // 2
    scale = 1.0 / math.sqrt(head_dim)  # fold the softmax scale into Q

    # rotate_half(t) * sin == pltpu.roll(t, half, -1) * sin_signed  (XLU roll, no concat)
    for h in range(num_heads):
        sl = slice(h * head_dim, (h + 1) * head_dim)
        qh = q[:, sl]
        qh = (qh * cos + pltpu.roll(qh, half, 1) * sin_s) * scale
        q_ref[0, :, sl] = qh.astype(jnp.bfloat16)

    for h in range(num_kv_heads):
        sl = slice(h * head_dim, (h + 1) * head_dim)
        kh = k[:, sl]
        kh = kh * cos + pltpu.roll(kh, half, 1) * sin_s
        k_ref[0, :, sl] = kh.astype(jnp.bfloat16)

    v_ref[0] = v.astype(jnp.bfloat16)


# ------------- kernel 2: flash attention (online softmax) + output proj -----------
def flash_attn_oproj_kernel(q_ref, k_ref, v_ref, wo_ref, out_ref,
                            m_scr, l_scr, acc_scr,
                            *, num_heads, num_kv_heads, head_dim):
    qi = pl.program_id(1)
    ki = pl.program_id(2)
    tq = q_ref.shape[1]
    tk = k_ref.shape[1]
    n_rep = num_heads // num_kv_heads

    @pl.when(ki == 0)
    def _init():
        m_scr[...] = jnp.full_like(m_scr, -jnp.inf)
        l_scr[...] = jnp.zeros_like(l_scr)
        acc_scr[...] = jnp.zeros_like(acc_scr)

    # Skip KV blocks entirely above the causal diagonal.
    @pl.when(ki * tk < (qi + 1) * tq)
    def _compute():
        # In-kernel causal mask (additive bias) -- no (B, S, S) mask from HBM.
        q_pos = qi * tq + jax.lax.broadcasted_iota(jnp.int32, (tq, tk), 0)
        k_pos = ki * tk + jax.lax.broadcasted_iota(jnp.int32, (tq, tk), 1)
        bias = jnp.where(q_pos >= k_pos, 0.0, -1e9).astype(jnp.float32)

        q = q_ref[0]          # (tq, H)   bf16  (scale already folded in)
        k = k_ref[0]          # (tk, Hkv) bf16
        v = v_ref[0]          # (tk, Hkv) bf16

        for hk in range(num_kv_heads):
            kv_sl = slice(hk * head_dim, (hk + 1) * head_dim)
            k_h = k[:, kv_sl]                       # shared by n_rep query heads (GQA)
            v_h = v[:, kv_sl]
            for r in range(n_rep):
                h = hk * n_rep + r
                q_sl = slice(h * head_dim, (h + 1) * head_dim)
                q_h = q[:, q_sl]                    # (tq, hd) bf16
                # Q K^T as an explicit dot_general (both contracting dims last -> MXU)
                s = jax.lax.dot_general(q_h, k_h, (((1,), (1,)), ((), ())),
                                        preferred_element_type=jnp.float32)
                s = s + bias                        # (tq, tk) f32

                m_prev = m_scr[h]                                        # (tq, 1)
                m_new = jnp.maximum(m_prev, jnp.max(s, axis=-1, keepdims=True))
                alpha = jnp.exp(m_prev - m_new)
                p = jnp.exp(s - m_new)                                   # (tq, tk) f32
                l_scr[h] = alpha * l_scr[h] + jnp.sum(p, axis=-1, keepdims=True)
                m_scr[h] = m_new

                pv = jnp.dot(p.astype(jnp.bfloat16), v_h,
                             preferred_element_type=jnp.float32)         # (tq, hd)
                acc_scr[:, q_sl] = alpha * acc_scr[:, q_sl] + pv

    @pl.when(ki == pl.num_programs(2) - 1)
    def _finalize():
        for h in range(num_heads):
            sl = slice(h * head_dim, (h + 1) * head_dim)
            inv = pl.reciprocal(l_scr[h], approx=True)       # EUP, effectively free
            acc_scr[:, sl] = acc_scr[:, sl] * inv
        o = acc_scr[...].astype(jnp.bfloat16)                # (tq, H) lane-dense
        out_ref[0] = jnp.dot(o, wo_ref[...], preferred_element_type=jnp.float32)


# ---------------------------------- wrapper ---------------------------------------
def eagle_attention_pallas(hidden_states, wq_t, wk_t, wv_t, wo_t, cos, sin,
                           *, num_heads, num_kv_heads,
                           block_q=128, block_kv=128, block_s=128):
    B, S, H = hidden_states.shape
    head_dim = H // num_heads
    Hkv = num_kv_heads * head_dim
    half = head_dim // 2

    block_q = min(block_q, S)
    block_kv = min(block_kv, S)
    block_s = min(block_s, S)
    assert S % block_q == 0 and S % block_kv == 0 and S % block_s == 0
    # TODO(synk): ragged / non-block-multiple sequence lengths need masked tails.

    # bf16 operands for the MXU (f32 accumulation inside the kernels); RoPE tables f32.
    x_bf = hidden_states.astype(jnp.bfloat16)
    wq_bf = wq_t.astype(jnp.bfloat16)
    wk_bf = wk_t.astype(jnp.bfloat16)
    wv_bf = wv_t.astype(jnp.bfloat16)
    wo_bf = wo_t.astype(jnp.bfloat16)
    cos_f = cos.astype(jnp.float32)
    # Fold the rotate_half sign pattern into sin (pure glue) so the kernel only rolls.
    sin_signed = jnp.concatenate([-sin[:, :half], sin[:, half:]],
                                 axis=-1).astype(jnp.float32)

    qkv = functools.partial(qkv_rope_kernel, num_heads=num_heads,
                            num_kv_heads=num_kv_heads, head_dim=head_dim)
    q_rot, k_rot, v_p = pl.pallas_call(
        qkv,
        out_shape=(jax.ShapeDtypeStruct((B, S, H), jnp.bfloat16),
                   jax.ShapeDtypeStruct((B, S, Hkv), jnp.bfloat16),
                   jax.ShapeDtypeStruct((B, S, Hkv), jnp.bfloat16)),
        grid=(B, S // block_s),
        in_specs=[
            pl.BlockSpec((1, block_s, H), lambda b, s: (b, s, 0)),       # hidden_states
            pl.BlockSpec((H, H), lambda b, s: (0, 0)),                   # Wq^T (resident)
            pl.BlockSpec((H, Hkv), lambda b, s: (0, 0)),                 # Wk^T
            pl.BlockSpec((H, Hkv), lambda b, s: (0, 0)),                 # Wv^T
            pl.BlockSpec((block_s, head_dim), lambda b, s: (s, 0)),      # cos[pos]
            pl.BlockSpec((block_s, head_dim), lambda b, s: (s, 0)),      # sin[pos]*sign
        ],
        out_specs=[
            pl.BlockSpec((1, block_s, H), lambda b, s: (b, s, 0)),
            pl.BlockSpec((1, block_s, Hkv), lambda b, s: (b, s, 0)),
            pl.BlockSpec((1, block_s, Hkv), lambda b, s: (b, s, 0)),
        ],
        compiler_params=pltpu.CompilerParams(
            dimension_semantics=("parallel", "parallel"),
            vmem_limit_bytes=32 * 1024 * 1024),
    )(x_bf, wq_bf, wk_bf, wv_bf, cos_f, sin_signed)

    flash = functools.partial(flash_attn_oproj_kernel, num_heads=num_heads,
                              num_kv_heads=num_kv_heads, head_dim=head_dim)
    out = pl.pallas_call(
        flash,
        out_shape=jax.ShapeDtypeStruct((B, S, H), jnp.float32),
        grid=(B, S // block_q, S // block_kv),
        in_specs=[
            pl.BlockSpec((1, block_q, H), lambda b, qi, ki: (b, qi, 0)),     # Q block
            pl.BlockSpec((1, block_kv, Hkv), lambda b, qi, ki: (b, ki, 0)),  # K block
            pl.BlockSpec((1, block_kv, Hkv), lambda b, qi, ki: (b, ki, 0)),  # V block
            # Constant index_map -> DMA'd once and kept resident across the grid.
            # TODO(synk): pipeline_mode=pl.Buffered(1) would halve its VMEM reservation.
            pl.BlockSpec((H, H), lambda b, qi, ki: (0, 0)),                  # Wo^T
        ],
        out_specs=pl.BlockSpec((1, block_q, H), lambda b, qi, ki: (b, qi, 0)),
        scratch_shapes=[
            pltpu.VMEM((num_heads, block_q, 1), jnp.float32),   # running max m
            pltpu.VMEM((num_heads, block_q, 1), jnp.float32),   # running sum l
            pltpu.VMEM((block_q, H), jnp.float32),              # output accumulator
        ],
        compiler_params=pltpu.CompilerParams(
            dimension_semantics=("parallel", "parallel", "arbitrary"),
            vmem_limit_bytes=32 * 1024 * 1024),
    )(q_rot, k_rot, v_p, wo_bf)
    return out


# ------------------------------ pure-JAX reference --------------------------------
def eagle_attention_ref(x, wq_t, wk_t, wv_t, wo_t, cos, sin, mask,
                        *, num_heads, num_kv_heads):
    B, S, H = x.shape
    head_dim = H // num_heads
    n_rep = num_heads // num_kv_heads

    q = x @ wq_t
    k = x @ wk_t
    v = x @ wv_t
    q = q.reshape(B, S, num_heads, head_dim).transpose(0, 2, 1, 3)
    k = k.reshape(B, S, num_kv_heads, head_dim).transpose(0, 2, 1, 3)
    v = v.reshape(B, S, num_kv_heads, head_dim).transpose(0, 2, 1, 3)

    half = head_dim // 2

    def rot(t):
        return jnp.concatenate([-t[..., half:], t[..., :half]], axis=-1)

    c = cos[None, None]
    s = sin[None, None]
    q = q * c + rot(q) * s
    k = k * c + rot(k) * s

    k = jnp.broadcast_to(k[:, :, None], (B, num_kv_heads, n_rep, S, head_dim)
                         ).reshape(B, num_heads, S, head_dim)
    v = jnp.broadcast_to(v[:, :, None], (B, num_kv_heads, n_rep, S, head_dim)
                         ).reshape(B, num_heads, S, head_dim)

    attn = jnp.einsum('bhqd,bhkd->bhqk', q, k) / math.sqrt(head_dim)
    attn = attn + mask[:, None]
    attn = jax.nn.softmax(attn, axis=-1)
    o = jnp.einsum('bhqk,bhkd->bhqd', attn, v)
    o = o.transpose(0, 2, 1, 3).reshape(B, S, H)
    return o @ wo_t


# ------------------------------------- main ----------------------------------------
if __name__ == "__main__":
    # Small config consistent with EAGLEAttention (GQA, no rope_scaling, no kv cache).
    B = 2
    S = 256
    hidden_size = 256
    num_heads = 2
    num_kv_heads = 1
    head_dim = hidden_size // num_heads          # 128
    Hkv = num_kv_heads * head_dim                # 128
    max_position_embeddings = 512
    rope_base = 10000.0

    key = jax.random.PRNGKey(0)
    kx, kq, kk, kv, ko = jax.random.split(key, 5)

    x = jax.random.normal(kx, (B, S, hidden_size), dtype=jnp.float32)

    # Weights stored directly as (in, out) = W_torch.T (so y = x @ W == F.linear).
    wscale = 0.05
    wq_t = wscale * jax.random.normal(kq, (hidden_size, hidden_size), jnp.float32)
    wk_t = wscale * jax.random.normal(kk, (hidden_size, Hkv), jnp.float32)
    wv_t = wscale * jax.random.normal(kv, (hidden_size, Hkv), jnp.float32)
    wo_t = wscale * jax.random.normal(ko, (hidden_size, hidden_size), jnp.float32)

    # EAGLERotaryEmbedding cache (no scaling), gathered by position_ids (pure glue).
    inv_freq = 1.0 / (rope_base ** (jnp.arange(0, head_dim, 2, dtype=jnp.float32)
                                    / head_dim))
    t = jnp.arange(max_position_embeddings, dtype=jnp.float32)
    freqs = jnp.einsum('i,j->ij', t, inv_freq)
    emb = jnp.concatenate([freqs, freqs], axis=-1)      # (max_pos, head_dim)
    cos_cached = jnp.cos(emb)
    sin_cached = jnp.sin(emb)

    position_ids = jnp.arange(S, dtype=jnp.int32)
    cos = cos_cached[position_ids]                      # (S, head_dim)
    sin = sin_cached[position_ids]

    out = eagle_attention_pallas(x, wq_t, wk_t, wv_t, wo_t, cos, sin,
                                 num_heads=num_heads, num_kv_heads=num_kv_heads,
                                 block_q=128, block_kv=128, block_s=128)
    out = jax.block_until_ready(out)

    # Reference uses the standard causal mask (the kernel generates it in-kernel).
    causal = jnp.tril(jnp.ones((S, S), dtype=bool))
    mask = jnp.where(causal, 0.0, -1e9).astype(jnp.float32)
    mask = jnp.broadcast_to(mask[None], (B, S, S))
    ref = eagle_attention_ref(x, wq_t, wk_t, wv_t, wo_t, cos, sin, mask,
                              num_heads=num_heads, num_kv_heads=num_kv_heads)
    ref = jax.block_until_ready(ref)

    assert out.shape == (B, S, hidden_size)
    # bf16 operands on the MXU (f32 accumulation / f32 softmax stats) vs f32 reference.
    max_err = float(jnp.max(jnp.abs(out - ref)))
    assert max_err < 1e-1, f"max abs err = {max_err}"

    # TODO(synk): past_key_value concat / use_cache, output_attentions, and
    # pretraining_tp>1 paths are not exercised (stateless single-call forward only).
    print("KERNEL_OK")
</pallas_src>

<mosaic_0001>
module attributes {stable_mosaic.version = 11 : i64} {
  func.func @qkv_rope_kernel(%arg0: i32, %arg1: i32, %arg2: memref<1x128x256xbf16, #tpu.memory_space<vmem>>, %arg3: memref<256x256xbf16, #tpu.memory_space<vmem>>, %arg4: memref<256x128xbf16, #tpu.memory_space<vmem>>, %arg5: memref<256x128xbf16, #tpu.memory_space<vmem>>, %arg6: memref<128x128xf32, #tpu.memory_space<vmem>>, %arg7: memref<128x128xf32, #tpu.memory_space<vmem>>, %arg8: memref<1x128x256xbf16, #tpu.memory_space<vmem>>, %arg9: memref<1x128x128xbf16, #tpu.memory_space<vmem>>, %arg10: memref<1x128x128xbf16, #tpu.memory_space<vmem>>) attributes {dimension_semantics = [#tpu.dimension_semantics<parallel>, #tpu.dimension_semantics<parallel>], iteration_bounds = array<i64: 2, 2>, scalar_prefetch = 0 : i64, scratch_operands = 0 : i64, tpu.core_type = #tpu.core_type<tc>, window_params = [{transform_indices = @transform_0, window_bounds = array<i64: 1, 128, 256>}, {pipeline_mode = #tpu.pipeline_mode<synchronous>, transform_indices = @transform_1, window_bounds = array<i64: 256, 256>}, {pipeline_mode = #tpu.pipeline_mode<synchronous>, transform_indices = @transform_2, window_bounds = array<i64: 256, 128>}, {pipeline_mode = #tpu.pipeline_mode<synchronous>, transform_indices = @transform_3, window_bounds = array<i64: 256, 128>}, {transform_indices = @transform_4, window_bounds = array<i64: 128, 128>}, {transform_indices = @transform_5, window_bounds = array<i64: 128, 128>}, {transform_indices = @transform_6, window_bounds = array<i64: 1, 128, 256>}, {transform_indices = @transform_7, window_bounds = array<i64: 1, 128, 128>}, {transform_indices = @transform_8, window_bounds = array<i64: 1, 128, 128>}]} {
    %c0 = arith.constant 0 : index
    %c0_0 = arith.constant 0 : index
    %c0_1 = arith.constant 0 : index
    %0 = vector.load %arg2[%c0, %c0_0, %c0_1] : memref<1x128x256xbf16, #tpu.memory_space<vmem>>, vector<1x128x256xbf16>
    %1 = vector.shape_cast %0 : vector<1x128x256xbf16> to vector<128x256xbf16>
    %c0_2 = arith.constant 0 : index
    %c0_3 = arith.constant 0 : index
    %2 = vector.load %arg3[%c0_2, %c0_3] : memref<256x256xbf16, #tpu.memory_space<vmem>>, vector<256x256xbf16>
    %cst = arith.constant dense<0.000000e+00> : vector<128x256xf32>
    %3 = tpu.matmul %1, %2, %cst {dimension_numbers = #tpu.dot_dimension_numbers<[1], [0], [0], [1], [0, 0, 1, 1], [], []>} : vector<128x256xbf16>, vector<256x256xbf16>, vector<128x256xf32> -> vector<128x256xf32>
    %c0_4 = arith.constant 0 : index
    %c0_5 = arith.constant 0 : index
    %4 = vector.load %arg4[%c0_4, %c0_5] : memref<256x128xbf16, #tpu.memory_space<vmem>>, vector<256x128xbf16>
    %cst_6 = arith.constant dense<0.000000e+00> : vector<128x128xf32>
    %5 = tpu.matmul %1, %4, %cst_6 {dimension_numbers = #tpu.dot_dimension_numbers<[1], [0], [0], [1], [0, 0, 1, 1], [], []>} : vector<128x256xbf16>, vector<256x128xbf16>, vector<128x128xf32> -> vector<128x128xf32>
    %c0_7 = arith.constant 0 : index
    %c0_8 = arith.constant 0 : index
    %6 = vector.load %arg5[%c0_7, %c0_8] : memref<256x128xbf16, #tpu.memory_space<vmem>>, vector<256x128xbf16>
    %cst_9 = arith.constant dense<0.000000e+00> : vector<128x128xf32>
    %7 = tpu.matmul %1, %6, %cst_9 {dimension_numbers = #tpu.dot_dimension_numbers<[1], [0], [0], [1], [0, 0, 1, 1], [], []>} : vector<128x256xbf16>, vector<256x128xbf16>, vector<128x128xf32> -> vector<128x128xf32>
    %c0_10 = arith.constant 0 : index
    %c0_11 = arith.constant 0 : index
    %8 = vector.load %arg6[%c0_10, %c0_11] : memref<128x128xf32, #tpu.memory_space<vmem>>, vector<128x128xf32>
    %c0_12 = arith.constant 0 : index
    %c0_13 = arith.constant 0 : index
    %9 = vector.load %arg7[%c0_12, %c0_13] : memref<128x128xf32, #tpu.memory_space<vmem>>, vector<128x128xf32>
    %10 = vector.extract_strided_slice %3 {offsets = [0, 0], sizes = [128, 128], strides = [1, 1]} : vector<128x256xf32> to vector<128x128xf32>
    %11 = arith.mulf %10, %8 : vector<128x128xf32>
    %c64_i32 = arith.constant 64 : i32
    %12 = tpu.dynamic_rotate %10 by %c64_i32 dim 1 : vector<128x128xf32>, i32 -> vector<128x128xf32>
    %13 = arith.mulf %12, %9 : vector<128x128xf32>
    %14 = arith.addf %11, %13 : vector<128x128xf32>
    %cst_14 = arith.constant 0.0883883461 : f32
    %15 = vector.broadcast %cst_14 : f32 to vector<128x128xf32>
    %16 = arith.mulf %14, %15 : vector<128x128xf32>
    %17 = arith.truncf %16 : vector<128x128xf32> to vector<128x128xbf16>
    %c0_15 = arith.constant 0 : index
    %c0_16 = arith.constant 0 : index
    %c0_17 = arith.constant 0 : index
    %18 = vector.load %arg8[%c0_15, %c0_16, %c0_17] : memref<1x128x256xbf16, #tpu.memory_space<vmem>>, vector<1x128x128xbf16>
    %19 = vector.shape_cast %18 : vector<1x128x128xbf16> to vector<128x128xbf16>
    %20 = vector.shape_cast %17 : vector<128x128xbf16> to vector<1x128x128xbf16>
    tpu.vector_store %arg8[%c0_15, %c0_16, %c0_17], %20 {strides = array<i32>} : memref<1x128x256xbf16, #tpu.memory_space<vmem>>, vector<1x128x128xbf16>,
    %21 = vector.extract_strided_slice %3 {offsets = [0, 128], sizes = [128, 128], strides = [1, 1]} : vector<128x256xf32> to vector<128x128xf32>
    %22 = arith.mulf %21, %8 : vector<128x128xf32>
    %c64_i32_18 = arith.constant 64 : i32
    %23 = tpu.dynamic_rotate %21 by %c64_i32_18 dim 1 : vector<128x128xf32>, i32 -> vector<128x128xf32>
    %24 = arith.mulf %23, %9 : vector<128x128xf32>
    %25 = arith.addf %22, %24 : vector<128x128xf32>
    %cst_19 = arith.constant 0.0883883461 : f32
    %26 = vector.broadcast %cst_19 : f32 to vector<128x128xf32>
    %27 = arith.mulf %25, %26 : vector<128x128xf32>
    %28 = arith.truncf %27 : vector<128x128xf32> to vector<128x128xbf16>
    %c0_20 = arith.constant 0 : index
    %c0_21 = arith.constant 0 : index
    %c128 = arith.constant 128 : index
    %29 = vector.load %arg8[%c0_20, %c0_21, %c128] : memref<1x128x256xbf16, #tpu.memory_space<vmem>>, vector<1x128x128xbf16>
    %30 = vector.shape_cast %29 : vector<1x128x128xbf16> to vector<128x128xbf16>
    %31 = vector.shape_cast %28 : vector<128x128xbf16> to vector<1x128x128xbf16>
    tpu.vector_store %arg8[%c0_20, %c0_21, %c128], %31 {strides = array<i32>} : memref<1x128x256xbf16, #tpu.memory_space<vmem>>, vector<1x128x128xbf16>,
    %32 = arith.mulf %5, %8 : vector<128x128xf32>
    %c64_i32_22 = arith.constant 64 : i32
    %33 = tpu.dynamic_rotate %5 by %c64_i32_22 dim 1 : vector<128x128xf32>, i32 -> vector<128x128xf32>
    %34 = arith.mulf %33, %9 : vector<128x128xf32>
    %35 = arith.addf %32, %34 : vector<128x128xf32>
    %36 = arith.truncf %35 : vector<128x128xf32> to vector<128x128xbf16>
    %c0_23 = arith.constant 0 : index
    %c0_24 = arith.constant 0 : index
    %c0_25 = arith.constant 0 : index
    %37 = vector.load %arg9[%c0_23, %c0_24, %c0_25] : memref<1x128x128xbf16, #tpu.memory_space<vmem>>, vector<1x128x128xbf16>
    %38 = vector.shape_cast %37 : vector<1x128x128xbf16> to vector<128x128xbf16>
    %39 = vector.shape_cast %36 : vector<128x128xbf16> to vector<1x128x128xbf16>
    tpu.vector_store %arg9[%c0_23, %c0_24, %c0_25], %39 {strides = array<i32>} : memref<1x128x128xbf16, #tpu.memory_space<vmem>>, vector<1x128x128xbf16>,
    %40 = arith.truncf %7 : vector<128x128xf32> to vector<128x128xbf16>
    %c0_26 = arith.constant 0 : index
    %c0_27 = arith.constant 0 : index
    %c0_28 = arith.constant 0 : index
    %41 = vector.load %arg10[%c0_26, %c0_27, %c0_28] : memref<1x128x128xbf16, #tpu.memory_space<vmem>>, vector<1x128x128xbf16>
    %42 = vector.shape_cast %41 : vector<1x128x128xbf16> to vector<128x128xbf16>
    %43 = vector.shape_cast %40 : vector<128x128xbf16> to vector<1x128x128xbf16>
    tpu.vector_store %arg10[%c0_26, %c0_27, %c0_28], %43 {strides = array<i32>} : memref<1x128x128xbf16, #tpu.memory_space<vmem>>, vector<1x128x128xbf16>,
    return
  }
  func.func @transform_0(%arg0: i32, %arg1: i32) -> (i32, i32, i32) {
    %c0_i32 = arith.constant 0 : i32
    %c0_i32_0 = arith.constant 0 : i32
    return %arg0, %arg1, %c0_i32 : i32, i32, i32
  }
  func.func @transform_1(%arg0: i32, %arg1: i32) -> (i32, i32) {
    %c0_i32 = arith.constant 0 : i32
    %c0_i32_0 = arith.constant 0 : i32
    %c0_i32_1 = arith.constant 0 : i32
    return %c0_i32, %c0_i32_0 : i32, i32
  }
  func.func @transform_2(%arg0: i32, %arg1: i32) -> (i32, i32) {
    %c0_i32 = arith.constant 0 : i32
    %c0_i32_0 = arith.constant 0 : i32
    %c0_i32_1 = arith.constant 0 : i32
    return %c0_i32, %c0_i32_0 : i32, i32
  }
  func.func @transform_3(%arg0: i32, %arg1: i32) -> (i32, i32) {
    %c0_i32 = arith.constant 0 : i32
    %c0_i32_0 = arith.constant 0 : i32
    %c0_i32_1 = arith.constant 0 : i32
    return %c0_i32, %c0_i32_0 : i32, i32
  }
  func.func @transform_4(%arg0: i32, %arg1: i32) -> (i32, i32) {
    %c0_i32 = arith.constant 0 : i32
    %c0_i32_0 = arith.constant 0 : i32
    return %arg1, %c0_i32 : i32, i32
  }
  func.func @transform_5(%arg0: i32, %arg1: i32) -> (i32, i32) {
    %c0_i32 = arith.constant 0 : i32
    %c0_i32_0 = arith.constant 0 : i32
    return %arg1, %c0_i32 : i32, i32
  }
  func.func @transform_6(%arg0: i32, %arg1: i32) -> (i32, i32, i32) {
    %c0_i32 = arith.constant 0 : i32
    %c0_i32_0 = arith.constant 0 : i32
    return %arg0, %arg1, %c0_i32 : i32, i32, i32
  }
  func.func @transform_7(%arg0: i32, %arg1: i32) -> (i32, i32, i32) {
    %c0_i32 = arith.constant 0 : i32
    %c0_i32_0 = arith.constant 0 : i32
    return %arg0, %arg1, %c0_i32 : i32, i32, i32
  }
  func.func @transform_8(%arg0: i32, %arg1: i32) -> (i32, i32, i32) {
    %c0_i32 = arith.constant 0 : i32
    %c0_i32_0 = arith.constant 0 : i32
    return %arg0, %arg1, %c0_i32 : i32, i32, i32
  }
}

</mosaic_0001>

<llo_original>
// kernel: tpu_custom_call.1
$region0: #{tpu_custom_call.1}
  #allocation0 [shape = 'u32[]', space=smem, size = 0x4, offset = 0x4, fixed_abs, tag = 'smem constant byte address 0x4 - core index']
  #allocation1 [shape = 'u32[144,128]{1,0:T(1,128)}', space=vmem, size = 0x12000, scoped, tag = 'internal scratch']
  %s0 = inlined_call_operand.hbm [shape: bf16[2,256,256], index: 0, kind: input, shape index: {}]
  %s1 = inlined_call_operand.hbm [shape: bf16[256,256], index: 1, kind: input, shape index: {}]
  %s2 = inlined_call_operand.hbm [shape: bf16[256,128], index: 2, kind: input, shape index: {}]
  %s3 = inlined_call_operand.hbm [shape: bf16[256,128], index: 3, kind: input, shape index: {}]
  %s4 = inlined_call_operand.hbm [shape: f32[256,128], index: 4, kind: input, shape index: {}]
  %s5 = inlined_call_operand.hbm [shape: f32[256,128], index: 5, kind: input, shape index: {}]
  %s6 = inlined_call_operand.hbm [shape: bf16[2,256,256], index: 6, kind: output, shape index: {0}]
  %s7 = inlined_call_operand.hbm [shape: bf16[2,256,128], index: 7, kind: output, shape index: {1}]
  %s8 = inlined_call_operand.hbm [shape: bf16[2,256,128], index: 8, kind: output, shape index: {2}]
  %9 = xla_tuple %s6, %s7, %s8
  %s10 = sld [smem:[#allocation0]]
  $region97: #{tpu_custom_call.1} parent=0
    _
  %s12 = ssub.s32 1, %s10
  %s13 = scalar_select 0, %s12, %s10
  $region1: #{tpu_custom_call.1} parent=0
    #allocation2 [shape = 'u8[131072]{0}', space=vmem, size = 0x20000, scoped, tag = 'input window, operand 0']
    #allocation3 [shape = 's32[2]{0}', space=sflag, size = 0x8, scoped, tag = 'scoped memory for tpu_custom_call.1']
    #allocation4 [shape = 's32[2]{0}', space=sflag, size = 0x8, scoped, tag = 'scoped memory for tpu_custom_call.1']
    #allocation5 [shape = 'u8[131072]{0}', space=vmem, size = 0x20000, scoped, tag = 'input window, operand 1, single buffered']
    #allocation6 [shape = 's32[1]{0}', space=sflag, size = 0x4, scoped, tag = 'scoped memory for tpu_custom_call.1']
    #allocation7 [shape = 'u8[65536]{0}', space=vmem, size = 0x10000, scoped, tag = 'input window, operand 2, single buffered']
    #allocation8 [shape = 'u8[65536]{0}', space=vmem, size = 0x10000, scoped, tag = 'input window, operand 3, single buffered']
    #allocation9 [shape = 's32[1]{0}', space=sflag, size = 0x4, scoped, tag = 'scoped memory for tpu_custom_call.1']
    #allocation10 [shape = 'u8[131072]{0}', space=vmem, size = 0x20000, scoped, tag = 'input window, operand 4']
    #allocation11 [shape = 'u8[131072]{0}', space=vmem, size = 0x20000, scoped, tag = 'input window, operand 5']
    #allocation12 [shape = 'u8[131072]{0}', space=vmem, size = 0x20000, scoped, tag = 'output window, operand 0']
    #allocation13 [shape = 'u8[65536]{0}', space=vmem, size = 0x10000, scoped, tag = 'output window, operand 1']
    #allocation14 [shape = 's32[2]{0}', space=sflag, size = 0x8, scoped, tag = 'scoped memory for tpu_custom_call.1']
    #allocation15 [shape = 'u8[65536]{0}', space=vmem, size = 0x10000, scoped, tag = 'output window, operand 2']
    %14 = vsyncpa [#allocation3], 0
    %s15 = scalar_lea.sflag [#allocation3], 1
    %16 = vsyncpa %s15, 0
    %17 = vsyncpa [#allocation6], 0
    %18 = vsyncpa [#allocation9], 0
    %19 = vsyncpa [#allocation4], 0
    %s20 = scalar_lea.sflag [#allocation4], 1
    %21 = vsyncpa %s20, 0
    %22 = vsyncpa [#allocation14], 0
    %s23 = scalar_lea.sflag [#allocation14], 1
    %24 = vsyncpa %s23, 0
    loop: start=0, step=1, limit=6
    $region2: #{tpu_custom_call.1} parent=1 // loop_pre_header
      _
    $region3: #{tpu_custom_call.1} parent=1 // loop_header
      %s26 = sphi 0, %s30
      %p27 = scmp.ge.s32.totalorder %s26, 6
      %s33 = sphi 0, %s45
      %s34 = sphi 0, %s41
      %s35 = sphi 0, %s33
      %s36 = sphi 0, %s34
      %s37 = sphi 0, %s35
      %s38 = sphi 0, %s36
      %s50 = sphi 0, %s52
      %s53 = sphi 0, %s50
      %s54 = sphi 0, %s53
      %s70 = sphi 0, %s54
      %s74 = sphi 0, %s74
      %s76 = sphi 0, %s74
      %s77 = sphi 0, %s76
      %s91 = sphi 0, %s77
      %s95 = sphi 0, %s95
      %s97 = sphi 0, %s95
      %s98 = sphi 0, %s97
      %s112 = sphi 0, %s98
      %s116 = sphi 0, %s116
      %s118 = sphi 0, %s116
      %s119 = sphi 0, %s118
      %s133 = sphi 0, %s119
      %s139 = sphi 0, %s141
      %s142 = sphi 0, %s139
      %s143 = sphi 0, %s142
      %s159 = sphi 0, %s143
      %s165 = sphi 0, %s167
      %s168 = sphi 0, %s165
      %s169 = sphi 0, %s168
      %s185 = sphi 0, %s169
      %s193 = sphi 0, %s195
      %s196 = sphi 0, %s193
      %s197 = sphi 0, %s196
      %s213 = sphi 0, %s197
      %s221 = sphi 0, %s223
      %s224 = sphi 0, %s221
      %s225 = sphi 0, %s224
      %s241 = sphi 0, %s225
      %s249 = sphi 0, %s251
      %s252 = sphi 0, %s249
      %s253 = sphi 0, %s252
      %s269 = sphi 0, %s253
    $region4: #{tpu_custom_call.1} parent=1 // loop_header_branch
      %29 = sbr.rel (%p27) target = $region8
    $region5: #{tpu_custom_call.1} parent=1 // loop_body
      %s31 = ssub.s32 %s26, 1
      %s32 = ssub.s32 %s26, 2
      %s39 = sadd.s32 1, %s34
      %p40 = scmp.ge.s32.totalorder %s39, 2
      %s41 = scalar_select %p40, 0, %s39
      %s42 = sadd.s32 1, %s33
      %s43 = scalar_select %p40, %s42, %s33
      %p44 = scmp.ge.s32.totalorder %s43, 2
      %s45 = scalar_select %p44, 0, %s43
      %s46 = ssub.s32 %s33, %s45
      %s47 = ssub.s32 %s34, %s41
      %s48 = sor.u32 %s46, %s47
      %p49 = scmp.eq.s32.totalorder %s48, 0
      %s51 = sadd.s32 %s50, 1
      %s52 = scalar_select %p49, %s50, %s51
      %p55 = pneg %p49
      %p56 = scmp.eq.s32.totalorder %s26, 3
      %p57 = por %p55, %p56
      %p58 = scmp.ne.s32.totalorder %s50, %s53
      %p59 = scmp.eq.s32.totalorder %s26, 0
      %p60 = por %p58, %p59
      %p61 = scmp.ne.s32.totalorder %s50, %s53
      %p62 = scmp.eq.s32.totalorder %s31, 3
      %p63 = por %p61, %p62
      %p64 = scmp.ne.s32.totalorder %s53, %s54
      %p65 = scmp.eq.s32.totalorder %s31, 0
      %p66 = por %p64, %p65
      %p67 = scmp.ne.s32.totalorder %s53, %s54
      %p68 = scmp.eq.s32.totalorder %s32, 3
      %p69 = por %p67, %p68
      %p71 = scmp.ne.s32.totalorder %s54, %s70
      %p72 = scmp.eq.s32.totalorder %s32, 0
      %p73 = por %p71, %p72
      %s75 = sadd.s32 %s74, 1
      %p78 = scmp.eq.s32.totalorder %s26, 3
      %p79 = scmp.ne.s32.totalorder %s74, %s76
      %p80 = scmp.eq.s32.totalorder %s26, 0
      %p81 = por %p79, %p80
      %p82 = scmp.ne.s32.totalorder %s74, %s76
      %p83 = scmp.eq.s32.totalorder %s31, 3
      %p84 = por %p82, %p83
      %p85 = scmp.ne.s32.totalorder %s76, %s77
      %p86 = scmp.eq.s32.totalorder %s31, 0
      %p87 = por %p85, %p86
      %p88 = scmp.ne.s32.totalorder %s76, %s77
      %p89 = scmp.eq.s32.totalorder %s32, 3
      %p90 = por %p88, %p89
      %p92 = scmp.ne.s32.totalorder %s77, %s91
      %p93 = scmp.eq.s32.totalorder %s32, 0
      %p94 = por %p92, %p93
      %s96 = sadd.s32 %s95, 1
      %p99 = scmp.eq.s32.totalorder %s26, 3
      %p100 = scmp.ne.s32.totalorder %s95, %s97
      %p101 = scmp.eq.s32.totalorder %s26, 0
      %p102 = por %p100, %p101
      %p103 = scmp.ne.s32.totalorder %s95, %s97
      %p104 = scmp.eq.s32.totalorder %s31, 3
      %p105 = por %p103, %p104
      %p106 = scmp.ne.s32.totalorder %s97, %s98
      %p107 = scmp.eq.s32.totalorder %s31, 0
      %p108 = por %p106, %p107
      %p109 = scmp.ne.s32.totalorder %s97, %s98
      %p110 = scmp.eq.s32.totalorder %s32, 3
      %p111 = por %p109, %p110
      %p113 = scmp.ne.s32.totalorder %s98, %s112
      %p114 = scmp.eq.s32.totalorder %s32, 0
      %p115 = por %p113, %p114
      %s117 = sadd.s32 %s116, 1
      %p120 = scmp.eq.s32.totalorder %s26, 3
      %p121 = scmp.ne.s32.totalorder %s116, %s118
      %p122 = scmp.eq.s32.totalorder %s26, 0
      %p123 = por %p121, %p122
      %p124 = scmp.ne.s32.totalorder %s116, %s118
      %p125 = scmp.eq.s32.totalorder %s31, 3
      %p126 = por %p124, %p125
      %p127 = scmp.ne.s32.totalorder %s118, %s119
      %p128 = scmp.eq.s32.totalorder %s31, 0
      %p129 = por %p127, %p128
      %p130 = scmp.ne.s32.totalorder %s118, %s119
      %p131 = scmp.eq.s32.totalorder %s32, 3
      %p132 = por %p130, %p131
      %p134 = scmp.ne.s32.totalorder %s119, %s133
      %p135 = scmp.eq.s32.totalorder %s32, 0
      %p136 = por %p134, %p135
      %s137 = ssub.s32 %s34, %s41
      %p138 = scmp.eq.s32.totalorder %s137, 0
      %s140 = sadd.s32 %s139, 1
      %s141 = scalar_select %p138, %s139, %s140
      %p144 = pneg %p138
      %p145 = scmp.eq.s32.totalorder %s26, 3
      %p146 = por %p144, %p145
      %p147 = scmp.ne.s32.totalorder %s139, %s142
      %p148 = scmp.eq.s32.totalorder %s26, 0
      %p149 = por %p147, %p148
      %p150 = scmp.ne.s32.totalorder %s139, %s142
      %p151 = scmp.eq.s32.totalorder %s31, 3
      %p152 = por %p150, %p151
      %p153 = scmp.ne.s32.totalorder %s142, %s143
      %p154 = scmp.eq.s32.totalorder %s31, 0
      %p155 = por %p153, %p154
      %p156 = scmp.ne.s32.totalorder %s142, %s143
      %p157 = scmp.eq.s32.totalorder %s32, 3
      %p158 = por %p156, %p157
      %p160 = scmp.ne.s32.totalorder %s143, %s159
      %p161 = scmp.eq.s32.totalorder %s32, 0
      %p162 = por %p160, %p161
      %s163 = ssub.s32 %s34, %s41
      %p164 = scmp.eq.s32.totalorder %s163, 0
      %s166 = sadd.s32 %s165, 1
      %s167 = scalar_select %p164, %s165, %s166
      %p170 = pneg %p164
      %p171 = scmp.eq.s32.totalorder %s26, 3
      %p172 = por %p170, %p171
      %p173 = scmp.ne.s32.totalorder %s165, %s168
      %p174 = scmp.eq.s32.totalorder %s26, 0
      %p175 = por %p173, %p174
      %p176 = scmp.ne.s32.totalorder %s165, %s168
      %p177 = scmp.eq.s32.totalorder %s31, 3
      %p178 = por %p176, %p177
      %p179 = scmp.ne.s32.totalorder %s168, %s169
      %p180 = scmp.eq.s32.totalorder %s31, 0
      %p181 = por %p179, %p180
      %p182 = scmp.ne.s32.totalorder %s168, %s169
      %p183 = scmp.eq.s32.totalorder %s32, 3
      %p184 = por %p182, %p183
      %p186 = scmp.ne.s32.totalorder %s169, %s185
      %p187 = scmp.eq.s32.totalorder %s32, 0
      %p188 = por %p186, %p187
      %s189 = ssub.s32 %s33, %s45
      %s190 = ssub.s32 %s34, %s41
      %s191 = sor.u32 %s189, %s190
      %p192 = scmp.eq.s32.totalorder %s191, 0
      %s194 = sadd.s32 %s193, 1
      %s195 = scalar_select %p192, %s193, %s194
      %p198 = pneg %p192
      %p199 = scmp.eq.s32.totalorder %s26, 3
      %p200 = por %p198, %p199
      %p201 = scmp.ne.s32.totalorder %s193, %s196
      %p202 = scmp.eq.s32.totalorder %s26, 0
      %p203 = por %p201, %p202
      %p204 = scmp.ne.s32.totalorder %s193, %s196
      %p205 = scmp.eq.s32.totalorder %s31, 3
      %p206 = por %p204, %p205
      %p207 = scmp.ne.s32.totalorder %s196, %s197
      %p208 = scmp.eq.s32.totalorder %s31, 0
      %p209 = por %p207, %p208
      %p210 = scmp.ne.s32.totalorder %s196, %s197
      %p211 = scmp.eq.s32.totalorder %s32, 3
      %p212 = por %p210, %p211
      %p214 = scmp.ne.s32.totalorder %s197, %s213
      %p215 = scmp.eq.s32.totalorder %s32, 0
      %p216 = por %p214, %p215
      %s217 = ssub.s32 %s33, %s45
      %s218 = ssub.s32 %s34, %s41
      %s219 = sor.u32 %s217, %s218
      %p220 = scmp.eq.s32.totalorder %s219, 0
      %s222 = sadd.s32 %s221, 1
      %s223 = scalar_select %p220, %s221, %s222
      %p226 = pneg %p220
      %p227 = scmp.eq.s32.totalorder %s26, 3
      %p228 = por %p226, %p227
      %p229 = scmp.ne.s32.totalorder %s221, %s224
      %p230 = scmp.eq.s32.totalorder %s26, 0
      %p231 = por %p229, %p230
      %p232 = scmp.ne.s32.totalorder %s221, %s224
      %p233 = scmp.eq.s32.totalorder %s31, 3
      %p234 = por %p232, %p233
      %p235 = scmp.ne.s32.totalorder %s224, %s225
      %p236 = scmp.eq.s32.totalorder %s31, 0
      %p237 = por %p235, %p236
      %p238 = scmp.ne.s32.totalorder %s224, %s225
      %p239 = scmp.eq.s32.totalorder %s32, 3
      %p240 = por %p238, %p239
      %p242 = scmp.ne.s32.totalorder %s225, %s241
      %p243 = scmp.eq.s32.totalorder %s32, 0
      %p244 = por %p242, %p243
      %s245 = ssub.s32 %s33, %s45
      %s246 = ssub.s32 %s34, %s41
      %s247 = sor.u32 %s245, %s246
      %p248 = scmp.eq.s32.totalorder %s247, 0
      %s250 = sadd.s32 %s249, 1
      %s251 = scalar_select %p248, %s249, %s250
      %p254 = pneg %p248
      %p255 = scmp.eq.s32.totalorder %s26, 3
      %p256 = por %p254, %p255
      %p257 = scmp.ne.s32.totalorder %s249, %s252
      %p258 = scmp.eq.s32.totalorder %s26, 0
      %p259 = por %p257, %p258
      %p260 = scmp.ne.s32.totalorder %s249, %s252
      %p261 = scmp.eq.s32.totalorder %s31, 3
      %p262 = por %p260, %p261
      %p263 = scmp.ne.s32.totalorder %s252, %s253
      %p264 = scmp.eq.s32.totalorder %s31, 0
      %p265 = por %p263, %p264
      %p266 = scmp.ne.s32.totalorder %s252, %s253
      %p267 = scmp.eq.s32.totalorder %s32, 3
      %p268 = por %p266, %p267
      %p270 = scmp.ne.s32.totalorder %s253, %s269
      %p271 = scmp.eq.s32.totalorder %s32, 0
      %p272 = por %p270, %p271
      %p273 = scmp.le.s32.totalorder 1, %s26
      %p274 = scmp.lt.s32.totalorder %s26, 5
      %p275 = pnand %p273, %p274
      %p276 = pneg %p275
      // Predicated region
      $region9: #{tpu_custom_call.1} parent=5 // pred_check
        _
      $region10: #{tpu_custom_call.1} parent=5 // pred_check_branch
        %278 = sbr.rel (%p275) target = $region12
      $region11: #{tpu_custom_call.1} parent=5 // pred_region
        %s279 = ssub.s32 %s26, 1
        // Predicated region
        $region13: #{tpu_custom_call.1} parent=11 // pred_check
          %p280 = pneg %p87
        $region14: #{tpu_custom_call.1} parent=11 // pred_check_branch
          %282 = sbr.rel (%p280) target = $region16
        $region15: #{tpu_custom_call.1} parent=11 // pred_region
          %s284 = ssub.s32 4096, 4096
          %285 = vsyncadd [#allocation6], %s284
          %s286 = sshll.u32 [#allocation5], 4
          %s287 = int_to_ptr.vmem [resolvable:$true] %s286
          %292 = dma.hbm_to_vmem [thread:$0]  %s1, 4096, %s287, [#allocation6], 128, 128, 8
        $region16: #{tpu_custom_call.1} parent=11 // pred_fallthru
          _
        // Predicated region
        $region17: #{tpu_custom_call.1} parent=11 // pred_check
          %p293 = pneg %p108
        $region18: #{tpu_custom_call.1} parent=11 // pred_check_branch
          %295 = sbr.rel (%p293) target = $region20
        $region19: #{tpu_custom_call.1} parent=11 // pred_region
          %s297 = ssub.s32 2048, 2048
          %298 = vsyncadd [#allocation6], %s297
          %s299 = sshll.u32 [#allocation7], 4
          %s300 = int_to_ptr.vmem [resolvable:$true] %s299
          %305 = dma.hbm_to_vmem [thread:$0]  %s2, 2048, %s300, [#allocation6], 64, 64, 4
        $region20: #{tpu_custom_call.1} parent=11 // pred_fallthru
          _
        // Predicated region
        $region21: #{tpu_custom_call.1} parent=11 // pred_check
          %p306 = pneg %p129
        $region22: #{tpu_custom_call.1} parent=11 // pred_check_branch
          %308 = sbr.rel (%p306) target = $region24
        $region23: #{tpu_custom_call.1} parent=11 // pred_region
          %s310 = ssub.s32 2048, 2048
          %311 = vsyncadd [#allocation9], %s310
          %s312 = sshll.u32 [#allocation8], 4
          %s313 = int_to_ptr.vmem [resolvable:$true] %s312
          %318 = dma.hbm_to_vmem [thread:$0]  %s3, 2048, %s313, [#allocation9], 64, 64, 4
        $region24: #{tpu_custom_call.1} parent=11 // pred_fallthru
          _
      $region12: #{tpu_custom_call.1} parent=5 // pred_fallthru
        _
      %p319 = scmp.lt.s32.totalorder %s26, 4
      // Predicated region
      $region25: #{tpu_custom_call.1} parent=5 // pred_check
        %p320 = pneg %p319
      $region26: #{tpu_custom_call.1} parent=5 // pred_check_branch
        %322 = sbr.rel (%p320) target = $region28
      $region27: #{tpu_custom_call.1} parent=5 // pred_region
        // Predicated region
        $region29: #{tpu_custom_call.1} parent=27 // pred_check
          %p323 = pneg %p60
        $region30: #{tpu_custom_call.1} parent=27 // pred_check_branch
          %325 = sbr.rel (%p323) target = $region32
        $region31: #{tpu_custom_call.1} parent=27 // pred_region
          %s326 = sand.u32 %s26, 1
          %s327 = scalar_lea.sflag [#allocation3], %s326
          %s328 = sand.u32 %s50, 1
          %s329 = smul.addr %s328, 128
          %s330 = scalar_lea.vmem [#allocation2], %s329
          %s331 = smul.u32 16, %s34
          %s333 = ssub.s32 2048, 2048
          %334 = vsyncadd %s327, %s333
          %s335 = smul.addr %s331, 2
          %s336 = smul.addr %s33, 64
          %s337 = sadd.s32 %s335, %s336
          %s338 = smul.addr %s337, 64
          %s339 = scalar_lea.hbm %s0, %s338
          %s340 = sshll.u32 %s330, 4
          %s341 = int_to_ptr.vmem [resolvable:$true] %s340
          %346 = dma.hbm_to_vmem [thread:$0]  %s339, 2048, %s341, %s327, 128, 128, 8
        $region32: #{tpu_custom_call.1} parent=27 // pred_fallthru
          _
        // Predicated region
        $region33: #{tpu_custom_call.1} parent=27 // pred_check
          %p347 = pneg %p149
        $region34: #{tpu_custom_call.1} parent=27 // pred_check_branch
          %349 = sbr.rel (%p347) target = $region36
        $region35: #{tpu_custom_call.1} parent=27 // pred_region
          %s350 = sand.u32 %s26, 1
          %s351 = scalar_lea.sflag [#allocation3], %s350
          %s352 = sand.u32 %s139, 1
          %s353 = smul.addr %s352, 128
          %s354 = scalar_lea.vmem [#allocation10], %s353
          %s355 = smul.u32 16, %s34
          %s357 = ssub.s32 2048, 2048
          %358 = vsyncadd %s351, %s357
          %s359 = smul.addr %s355, 128
          %s360 = scalar_lea.hbm %s4, %s359
          %s361 = sshll.u32 %s354, 4
          %s362 = int_to_ptr.vmem [resolvable:$true] %s361
          %367 = dma.hbm_to_vmem [thread:$0]  %s360, 2048, %s362, %s351, 128, 128, 8
        $region36: #{tpu_custom_call.1} parent=27 // pred_fallthru
          _
        // Predicated region
        $region37: #{tpu_custom_call.1} parent=27 // pred_check
          %p368 = pneg %p175
        $region38: #{tpu_custom_call.1} parent=27 // pred_check_branch
          %370 = sbr.rel (%p368) target = $region40
        $region39: #{tpu_custom_call.1} parent=27 // pred_region
          %s371 = sand.u32 %s26, 1
          %s372 = scalar_lea.sflag [#allocation3], %s371
          %s373 = sand.u32 %s165, 1
          %s374 = smul.addr %s373, 128
          %s375 = scalar_lea.vmem [#allocation11], %s374
          %s376 = smul.u32 16, %s34
          %s378 = ssub.s32 2048, 2048
          %379 = vsyncadd %s372, %s378
          %s380 = smul.addr %s376, 128
          %s381 = scalar_lea.hbm %s5, %s380
          %s382 = sshll.u32 %s375, 4
          %s383 = int_to_ptr.vmem [resolvable:$true] %s382
          %388 = dma.hbm_to_vmem [thread:$0]  %s381, 2048, %s383, %s372, 128, 128, 8
        $region40: #{tpu_custom_call.1} parent=27 // pred_fallthru
          _
      $region28: #{tpu_custom_call.1} parent=5 // pred_fallthru
        _
      %p389 = scmp.le.s32.totalorder 1, %s26
      %p390 = scmp.lt.s32.totalorder %s26, 5
      %p391 = pnand %p389, %p390
      %p392 = pneg %p391
      // Predicated region
      $region41: #{tpu_custom_call.1} parent=5 // pred_check
        _
      $region42: #{tpu_custom_call.1} parent=5 // pred_check_branch
        %394 = sbr.rel (%p391) target = $region44
      $region43: #{tpu_custom_call.1} parent=5 // pred_region
        %s395 = ssub.s32 %s26, 1
        %s396 = sand.u32 %s31, 1
        %s397 = scalar_lea.sflag [#allocation3], %s396
        %s398 = sand.u32 %s53, 1
        %s399 = smul.addr %s398, 128
        %s400 = scalar_lea.vmem [#allocation2], %s399
        // Predicated region
        $region45: #{tpu_custom_call.1} parent=43 // pred_check
          %p401 = pneg %p66
        $region46: #{tpu_custom_call.1} parent=43 // pred_check_branch
          %403 = sbr.rel (%p401) target = $region48
        $region47: #{tpu_custom_call.1} parent=43 // pred_region
          %404 = dma.done %s397, 2048
        $region48: #{tpu_custom_call.1} parent=43 // pred_fallthru
          _
        // Predicated region
        $region49: #{tpu_custom_call.1} parent=43 // pred_check
          %p405 = pneg %p87
        $region50: #{tpu_custom_call.1} parent=43 // pred_check_branch
          %407 = sbr.rel (%p405) target = $region52
        $region51: #{tpu_custom_call.1} parent=43 // pred_region
          %408 = dma.done [#allocation6], 4096
        $region52: #{tpu_custom_call.1} parent=43 // pred_fallthru
          _
        // Predicated region
        $region53: #{tpu_custom_call.1} parent=43 // pred_check
          %p409 = pneg %p108
        $region54: #{tpu_custom_call.1} parent=43 // pred_check_branch
          %411 = sbr.rel (%p409) target = $region56
        $region55: #{tpu_custom_call.1} parent=43 // pred_region
          %412 = dma.done [#allocation6], 2048
        $region56: #{tpu_custom_call.1} parent=43 // pred_fallthru
          _
        // Predicated region
        $region57: #{tpu_custom_call.1} parent=43 // pred_check
          %p413 = pneg %p129
        $region58: #{tpu_custom_call.1} parent=43 // pred_check_branch
          %415 = sbr.rel (%p413) target = $region60
        $region59: #{tpu_custom_call.1} parent=43 // pred_region
          %416 = dma.done [#allocation9], 2048
        $region60: #{tpu_custom_call.1} parent=43 // pred_fallthru
          _
        %s417 = sand.u32 %s31, 1
        %s418 = scalar_lea.sflag [#allocation3], %s417
        %s419 = sand.u32 %s142, 1
        %s420 = smul.addr %s419, 128
        %s421 = scalar_lea.vmem [#allocation10], %s420
        // Predicated region
        $region61: #{tpu_custom_call.1} parent=43 // pred_check
          %p422 = pneg %p155
        $region62: #{tpu_custom_call.1} parent=43 // pred_check_branch
          %424 = sbr.rel (%p422) target = $region64
        $region63: #{tpu_custom_call.1} parent=43 // pred_region
          %425 = dma.done %s418, 2048
        $region64: #{tpu_custom_call.1} parent=43 // pred_fallthru
          _
        %s426 = sand.u32 %s31, 1
        %s427 = scalar_lea.sflag [#allocation3], %s426
        %s428 = sand.u32 %s168, 1
        %s429 = smul.addr %s428, 128
        %s430 = scalar_lea.vmem [#allocation11], %s429
        // Predicated region
        $region65: #{tpu_custom_call.1} parent=43 // pred_check
          %p431 = pneg %p181
        $region66: #{tpu_custom_call.1} parent=43 // pred_check_branch
          %433 = sbr.rel (%p431) target = $region68
        $region67: #{tpu_custom_call.1} parent=43 // pred_region
          %434 = dma.done %s427, 2048
        $region68: #{tpu_custom_call.1} parent=43 // pred_fallthru
          _
        %s435 = sand.u32 %s31, 1
        %s436 = scalar_lea.sflag [#allocation3], %s435
        %s437 = sand.u32 %s53, 1
        %s438 = smul.addr %s437, 128
        %s439 = scalar_lea.vmem [#allocation2], %s438
        %p440 = pneg %p66
        %p441 = pneg %p63
        %p442 = pneg %p87
        %p443 = pneg %p84
        %p444 = pneg %p108
        %p445 = pneg %p105
        %p446 = pneg %p129
        %p447 = pneg %p126
        %s448 = sand.u32 %s31, 1
        %s449 = scalar_lea.sflag [#allocation3], %s448
        %s450 = sand.u32 %s142, 1
        %s451 = smul.addr %s450, 128
        %s452 = scalar_lea.vmem [#allocation10], %s451
        %p453 = pneg %p155
        %p454 = pneg %p152
        %s455 = sand.u32 %s31, 1
        %s456 = scalar_lea.sflag [#allocation3], %s455
        %s457 = sand.u32 %s168, 1
        %s458 = smul.addr %s457, 128
        %s459 = scalar_lea.vmem [#allocation11], %s458
        %p460 = pneg %p181
        %p461 = pneg %p178
        %p462 = pneg %p209
        %p463 = pneg %p206
        %s464 = sand.u32 %s196, 1
        %s465 = scalar_lea.sflag [#allocation4], %s464
        %s466 = sand.u32 %s196, 1
        %s467 = smul.addr %s466, 128
        %s468 = scalar_lea.vmem [#allocation12], %s467
        %p469 = pneg %p237
        %p470 = pneg %p234
        %s471 = sand.u32 %s31, 1
        %s472 = scalar_lea.sflag [#allocation14], %s471
        %s473 = sand.u32 %s224, 1
        %s474 = smul.addr %s473, 64
        %s475 = scalar_lea.vmem [#allocation13], %s474
        %p476 = pneg %p265
        %p477 = pneg %p262
        %s478 = sand.u32 %s31, 1
        %s479 = scalar_lea.sflag [#allocation14], %s478
        %s480 = sand.u32 %s252, 1
        %s481 = smul.addr %s480, 64
        %s482 = scalar_lea.vmem [#allocation15], %s481
        %s483 = smul.u32 16, %s36
        %s484 = smul.u32 16, %s36
        %s485 = smul.u32 16, %s36
        %s486 = smul.u32 16, %s36
        %s487 = smul.u32 16, %s36
        %s488 = smul.u32 16, %s36
        %v490 = vld [vmem:[%s400] sm:$0xff]
        %v491 = vld [vmem:[%s400 + $0x8] sm:$0xff]
        %v492 = vld [vmem:[%s400 + $0x10] sm:$0xff]
        %v493 = vld [vmem:[%s400 + $0x18] sm:$0xff]
        %v494 = vld [vmem:[%s400 + $0x20] sm:$0xff]
        %v495 = vld [vmem:[%s400 + $0x28] sm:$0xff]
        %v496 = vld [vmem:[%s400 + $0x30] sm:$0xff]
        %v497 = vld [vmem:[%s400 + $0x38] sm:$0xff]
        %v498 = vld [vmem:[%s400 + $0x40] sm:$0xff]
        %v499 = vld [vmem:[%s400 + $0x48] sm:$0xff]
        %v500 = vld [vmem:[%s400 + $0x50] sm:$0xff]
        %v501 = vld [vmem:[%s400 + $0x58] sm:$0xff]
        %v502 = vld [vmem:[%s400 + $0x60] sm:$0xff]
        %v503 = vld [vmem:[%s400 + $0x68] sm:$0xff]
        %v504 = vld [vmem:[%s400 + $0x70] sm:$0xff]
        %v505 = vld [vmem:[%s400 + $0x78] sm:$0xff]
        %v506 = vld [vmem:[#allocation5] sm:$0xff]
        %v507 = vld [vmem:[#allocation5 + $0x8] sm:$0xff]
        %v508 = vld [vmem:[#allocation5 + $0x10] sm:$0xff]
        %v509 = vld [vmem:[#allocation5 + $0x18] sm:$0xff]
        %v510 = vld [vmem:[#allocation5 + $0x20] sm:$0xff]
        %v511 = vld [vmem:[#allocation5 + $0x28] sm:$0xff]
        %v512 = vld [vmem:[#allocation5 + $0x30] sm:$0xff]
        %v513 = vld [vmem:[#allocation5 + $0x38] sm:$0xff]
        %v514 = vld [vmem:[#allocation5 + $0x40] sm:$0xff]
        %v515 = vld [vmem:[#allocation5 + $0x48] sm:$0xff]
        %v516 = vld [vmem:[#allocation5 + $0x50] sm:$0xff]
        %v517 = vld [vmem:[#allocation5 + $0x58] sm:$0xff]
        %v518 = vld [vmem:[#allocation5 + $0x60] sm:$0xff]
        %v519 = vld [vmem:[#allocation5 + $0x68] sm:$0xff]
        %v520 = vld [vmem:[#allocation5 + $0x70] sm:$0xff]
        %v521 = vld [vmem:[#allocation5 + $0x78] sm:$0xff]
        %v522 = vld [vmem:[#allocation5 + $0x80] sm:$0xff]
        %v523 = vld [vmem:[#allocation5 + $0x88] sm:$0xff]
        %v524 = vld [vmem:[#allocation5 + $0x90] sm:$0xff]
        %v525 = vld [vmem:[#allocation5 + $0x98] sm:$0xff]
        %v526 = vld [vmem:[#allocation5 + $0xa0] sm:$0xff]
        %v527 = vld [vmem:[#allocation5 + $0xa8] sm:$0xff]
        %v528 = vld [vmem:[#allocation5 + $0xb0] sm:$0xff]
        %v529 = vld [vmem:[#allocation5 + $0xb8] sm:$0xff]
        %v530 = vld [vmem:[#allocation5 + $0xc0] sm:$0xff]
        %v531 = vld [vmem:[#allocation5 + $0xc8] sm:$0xff]
        %v532 = vld [vmem:[#allocation5 + $0xd0] sm:$0xff]
        %v533 = vld [vmem:[#allocation5 + $0xd8] sm:$0xff]
        %v534 = vld [vmem:[#allocation5 + $0xe0] sm:$0xff]
        %v535 = vld [vmem:[#allocation5 + $0xe8] sm:$0xff]
        %v536 = vld [vmem:[#allocation5 + $0xf0] sm:$0xff]
        %v537 = vld [vmem:[#allocation5 + $0xf8] sm:$0xff]
        %v554 = vunpack.c.l.b16 %v490
        %v555 = vunpack.c.h.b16 %v490
        %v556 = vunpack.c.l.b16 %v491
        %v557 = vunpack.c.h.b16 %v491
        %v558 = vunpack.c.l.b16 %v492
        %v559 = vunpack.c.h.b16 %v492
        %v560 = vunpack.c.l.b16 %v493
        %v561 = vunpack.c.h.b16 %v493
        %v562 = vunpack.c.l.b16 %v494
        %v563 = vunpack.c.h.b16 %v494
        %v564 = vunpack.c.l.b16 %v495
        %v565 = vunpack.c.h.b16 %v495
        %v566 = vunpack.c.l.b16 %v496
        %v567 = vunpack.c.h.b16 %v496
        %v568 = vunpack.c.l.b16 %v497
        %v569 = vunpack.c.h.b16 %v497
        %v570 = vunpack.c.l.b16 %v498
        %v571 = vunpack.c.h.b16 %v498
        %v572 = vunpack.c.l.b16 %v499
        %v573 = vunpack.c.h.b16 %v499
        %v574 = vunpack.c.l.b16 %v500
        %v575 = vunpack.c.h.b16 %v500
        %v576 = vunpack.c.l.b16 %v501
        %v577 = vunpack.c.h.b16 %v501
        %v578 = vunpack.c.l.b16 %v502
        %v579 = vunpack.c.h.b16 %v502
        %v580 = vunpack.c.l.b16 %v503
        %v581 = vunpack.c.h.b16 %v503
        %v582 = vunpack.c.l.b16 %v504
        %v583 = vunpack.c.h.b16 %v504
        %v584 = vunpack.c.l.b16 %v505
        %v585 = vunpack.c.h.b16 %v505
        %v586 = vpack.c.b16 %v556, %v554
        %v587 = vpack.c.b16 %v557, %v555
        %v588 = vpack.c.b16 %v560, %v558
        %v589 = vpack.c.b16 %v561, %v559
        %v590 = vpack.c.b16 %v564, %v562
        %v591 = vpack.c.b16 %v565, %v563
        %v592 = vpack.c.b16 %v568, %v566
        %v593 = vpack.c.b16 %v569, %v567
        %v594 = vpack.c.b16 %v572, %v570
        %v595 = vpack.c.b16 %v573, %v571
        %v596 = vpack.c.b16 %v576, %v574
        %v597 = vpack.c.b16 %v577, %v575
        %v598 = vpack.c.b16 %v580, %v578
        %v599 = vpack.c.b16 %v581, %v579
        %v600 = vpack.c.b16 %v584, %v582
        %v601 = vpack.c.b16 %v585, %v583
        %v650 = vunpack.c.l.b16 %v506
        %v651 = vunpack.c.h.b16 %v506
        %v652 = vunpack.c.l.b16 %v507
        %v653 = vunpack.c.h.b16 %v507
        %v654 = vunpack.c.l.b16 %v508
        %v655 = vunpack.c.h.b16 %v508
        %v656 = vunpack.c.l.b16 %v509
        %v657 = vunpack.c.h.b16 %v509
        %v658 = vunpack.c.l.b16 %v510
        %v659 = vunpack.c.h.b16 %v510
        %v660 = vunpack.c.l.b16 %v511
        %v661 = vunpack.c.h.b16 %v511
        %v662 = vunpack.c.l.b16 %v512
        %v663 = vunpack.c.h.b16 %v512
        %v664 = vunpack.c.l.b16 %v513
        %v665 = vunpack.c.h.b16 %v513
        %v666 = vunpack.c.l.b16 %v514
        %v667 = vunpack.c.h.b16 %v514
        %v668 = vunpack.c.l.b16 %v515
        %v669 = vunpack.c.h.b16 %v515
        %v670 = vunpack.c.l.b16 %v516
        %v671 = vunpack.c.h.b16 %v516
        %v672 = vunpack.c.l.b16 %v517
        %v673 = vunpack.c.h.b16 %v517
        %v674 = vunpack.c.l.b16 %v518
        %v675 = vunpack.c.h.b16 %v518
        %v676 = vunpack.c.l.b16 %v519
        %v677 = vunpack.c.h.b16 %v519
        %v678 = vunpack.c.l.b16 %v520
        %v679 = vunpack.c.h.b16 %v520
        %v680 = vunpack.c.l.b16 %v521
        %v681 = vunpack.c.h.b16 %v521
        %v682 = vunpack.c.l.b16 %v522
        %v683 = vunpack.c.h.b16 %v522
        %v684 = vunpack.c.l.b16 %v523
        %v685 = vunpack.c.h.b16 %v523
        %v686 = vunpack.c.l.b16 %v524
        %v687 = vunpack.c.h.b16 %v524
        %v688 = vunpack.c.l.b16 %v525
        %v689 = vunpack.c.h.b16 %v525
        %v690 = vunpack.c.l.b16 %v526
        %v691 = vunpack.c.h.b16 %v526
        %v692 = vunpack.c.l.b16 %v527
        %v693 = vunpack.c.h.b16 %v527
        %v694 = vunpack.c.l.b16 %v528
        %v695 = vunpack.c.h.b16 %v528
        %v696 = vunpack.c.l.b16 %v529
        %v697 = vunpack.c.h.b16 %v529
        %v698 = vunpack.c.l.b16 %v530
        %v699 = vunpack.c.h.b16 %v530
        %v700 = vunpack.c.l.b16 %v531
        %v701 = vunpack.c.h.b16 %v531
        %v702 = vunpack.c.l.b16 %v532
        %v703 = vunpack.c.h.b16 %v532
        %v704 = vunpack.c.l.b16 %v533
        %v705 = vunpack.c.h.b16 %v533
        %v706 = vunpack.c.l.b16 %v534
        %v707 = vunpack.c.h.b16 %v534
        %v708 = vunpack.c.l.b16 %v535
        %v709 = vunpack.c.h.b16 %v535
        %v710 = vunpack.c.l.b16 %v536
        %v711 = vunpack.c.h.b16 %v536
        %v712 = vunpack.c.l.b16 %v537
        %v713 = vunpack.c.h.b16 %v537
        %v714 = vpack.c.b16 %v652, %v650
        %v715 = vpack.c.b16 %v653, %v651
        %v716 = vpack.c.b16 %v656, %v654
        %v717 = vpack.c.b16 %v657, %v655
        %v718 = vpack.c.b16 %v660, %v658
        %v719 = vpack.c.b16 %v661, %v659
        %v720 = vpack.c.b16 %v664, %v662
        %v721 = vpack.c.b16 %v665, %v663
        %v722 = vpack.c.b16 %v668, %v666
        %v723 = vpack.c.b16 %v669, %v667
        %v724 = vpack.c.b16 %v672, %v670
        %v725 = vpack.c.b16 %v673, %v671
        %v726 = vpack.c.b16 %v676, %v674
        %v727 = vpack.c.b16 %v677, %v675
        %v728 = vpack.c.b16 %v680, %v678
        %v729 = vpack.c.b16 %v681, %v679
        %v730 = vpack.c.b16 %v684, %v682
        %v731 = vpack.c.b16 %v685, %v683
        %v732 = vpack.c.b16 %v688, %v686
        %v733 = vpack.c.b16 %v689, %v687
        %v734 = vpack.c.b16 %v692, %v690
        %v735 = vpack.c.b16 %v693, %v691
        %v736 = vpack.c.b16 %v696, %v694
        %v737 = vpack.c.b16 %v697, %v695
        %v738 = vpack.c.b16 %v700, %v698
        %v739 = vpack.c.b16 %v701, %v699
        %v740 = vpack.c.b16 %v704, %v702
        %v741 = vpack.c.b16 %v705, %v703
        %v742 = vpack.c.b16 %v708, %v706
        %v743 = vpack.c.b16 %v709, %v707
        %v744 = vpack.c.b16 %v712, %v710
        %v745 = vpack.c.b16 %v713, %v711
        %778 = vmatprep.subr.bf16.mxu0 %v715
        %779 = vmatpush1.bf16.msra.mxu0 %v714
        %780 = vmatprep.subr.bf16.mxu0 %v717
        %781 = vmatpush1.bf16.msra.mxu0 %v716
        %782 = vmatprep.subr.bf16.mxu0 %v719
        %783 = vmatpush1.bf16.msra.mxu0 %v718
        %784 = vmatprep.subr.bf16.mxu0 %v721
        %785 = vmatpush1.bf16.msra.mxu0 %v720
        %786 = vmatprep.subr.bf16.mxu0 %v723
        %787 = vmatpush1.bf16.msra.mxu0 %v722
        %788 = vmatprep.subr.bf16.mxu0 %v725
        %789 = vmatpush1.bf16.msra.mxu0 %v724
        %790 = vmatprep.subr.bf16.mxu0 %v727
        %791 = vmatpush1.bf16.msra.mxu0 %v726
        %792 = vmatprep.subr.bf16.mxu0 %v729
        %793 = vmatpush1.bf16.msra.mxu0 %v728
        %794 = vmatprep.subr.bf16.mxu0 %v731
        %795 = vmatpush1.bf16.msra.mxu0 %v730
        %796 = vmatprep.subr.bf16.mxu0 %v733
        %797 = vmatpush1.bf16.msra.mxu0 %v732
        %798 = vmatprep.subr.bf16.mxu0 %v735
        %799 = vmatpush1.bf16.msra.mxu0 %v734
        %800 = vmatprep.subr.bf16.mxu0 %v737
        %801 = vmatpush1.bf16.msra.mxu0 %v736
        %802 = vmatprep.subr.bf16.mxu0 %v739
        %803 = vmatpush1.bf16.msra.mxu0 %v738
        %804 = vmatprep.subr.bf16.mxu0 %v741
        %805 = vmatpush1.bf16.msra.mxu0 %v740
        %806 = vmatprep.subr.bf16.mxu0 %v743
        %807 = vmatpush1.bf16.msra.mxu0 %v742
        %808 = vmatprep.subr.bf16.mxu0 %v745
        %809 = vmatpush1.bf16.msra.mxu0 %v744
        %810 = vmatprep.mubr.bf16.mxu0 %v587
        %811 = vmatmul.mubr.bf16.gmra.mrb[0].mxu0 %v586
        %v812 = vpop.f32.mrb[0].mxu0
        %v813 = vadd.f32 0.0, %v812
        %v814 = vpop.f32.mrb[0].mxu0
        %v815 = vadd.f32 0.0, %v814
        %v816 = vpop.f32.mrb[0].mxu0
        %v817 = vadd.f32 0.0, %v816
        %v818 = vpop.f32.mrb[0].mxu0
        %v819 = vadd.f32 0.0, %v818
        %820 = vmatprep.mubr.bf16.mxu0 %v589
        %821 = vmatmul.mubr.bf16.gmra.mrb[0].mxu0 %v588
        %v822 = vpop.f32.mrb[0].mxu0
        %v823 = vadd.f32 0.0, %v822
        %v824 = vpop.f32.mrb[0].mxu0
        %v825 = vadd.f32 0.0, %v824
        %v826 = vpop.f32.mrb[0].mxu0
        %v827 = vadd.f32 0.0, %v826
        %v828 = vpop.f32.mrb[0].mxu0
        %v829 = vadd.f32 0.0, %v828
        %830 = vmatprep.mubr.bf16.mxu0 %v591
        %831 = vmatmul.mubr.bf16.gmra.mrb[0].mxu0 %v590
        %v832 = vpop.f32.mrb[0].mxu0
        %v833 = vadd.f32 0.0, %v832
        %v834 = vpop.f32.mrb[0].mxu0
        %v835 = vadd.f32 0.0, %v834
        %v836 = vpop.f32.mrb[0].mxu0
        %v837 = vadd.f32 0.0, %v836
        %v838 = vpop.f32.mrb[0].mxu0
        %v839 = vadd.f32 0.0, %v838
        %840 = vmatprep.mubr.bf16.mxu0 %v593
        %841 = vmatmul.mubr.bf16.gmra.mrb[0].mxu0 %v592
        %v842 = vpop.f32.mrb[0].mxu0
        %v843 = vadd.f32 0.0, %v842
        %v844 = vpop.f32.mrb[0].mxu0
        %v845 = vadd.f32 0.0, %v844
        %v846 = vpop.f32.mrb[0].mxu0
        %v847 = vadd.f32 0.0, %v846
        %v848 = vpop.f32.mrb[0].mxu0
        %v849 = vadd.f32 0.0, %v848
        %850 = vmatprep.mubr.bf16.mxu0 %v595
        %851 = vmatmul.mubr.bf16.gmra.mrb[0].mxu0 %v594
        %v852 = vpop.f32.mrb[0].mxu0
        %v853 = vadd.f32 0.0, %v852
        %v854 = vpop.f32.mrb[0].mxu0
        %v855 = vadd.f32 0.0, %v854
        %v856 = vpop.f32.mrb[0].mxu0
        %v857 = vadd.f32 0.0, %v856
        %v858 = vpop.f32.mrb[0].mxu0
        %v859 = vadd.f32 0.0, %v858
        %860 = vmatprep.mubr.bf16.mxu0 %v597
        %861 = vmatmul.mubr.bf16.gmra.mrb[0].mxu0 %v596
        %v862 = vpop.f32.mrb[0].mxu0
        %v863 = vadd.f32 0.0, %v862
        %v864 = vpop.f32.mrb[0].mxu0
        %v865 = vadd.f32 0.0, %v864
        %v866 = vpop.f32.mrb[0].mxu0
        %v867 = vadd.f32 0.0, %v866
        %v868 = vpop.f32.mrb[0].mxu0
        %v869 = vadd.f32 0.0, %v868
        %870 = vmatprep.mubr.bf16.mxu0 %v599
        %871 = vmatmul.mubr.bf16.gmra.mrb[0].mxu0 %v598
        %v872 = vpop.f32.mrb[0].mxu0
        %v873 = vadd.f32 0.0, %v872
        %v874 = vpop.f32.mrb[0].mxu0
        %v875 = vadd.f32 0.0, %v874
        %v876 = vpop.f32.mrb[0].mxu0
        %v877 = vadd.f32 0.0, %v876
        %v878 = vpop.f32.mrb[0].mxu0
        %v879 = vadd.f32 0.0, %v878
        %880 = vmatprep.mubr.bf16.mxu0 %v601
        %881 = vmatmul.mubr.bf16.gmra.mrb[0].mxu0 %v600
        %v882 = vpop.f32.mrb[0].mxu0
        %v883 = vadd.f32 0.0, %v882
        %v884 = vpop.f32.mrb[0].mxu0
        %v885 = vadd.f32 0.0, %v884
        %v886 = vpop.f32.mrb[0].mxu0
        %v887 = vadd.f32 0.0, %v886
        %v888 = vpop.f32.mrb[0].mxu0
        %v889 = vadd.f32 0.0, %v888
        %890 = vdwg.mxu0
        %v891 = vld [vmem:[#allocation7] sm:$0xf]
        %v892 = vld [vmem:[#allocation7 + $0x4] sm:$0xf]
        %v893 = vld [vmem:[#allocation7 + $0x8] sm:$0xf]
        %v894 = vld [vmem:[#allocation7 + $0xc] sm:$0xf]
        %v895 = vld [vmem:[#allocation7 + $0x10] sm:$0xf]
        %v896 = vld [vmem:[#allocation7 + $0x14] sm:$0xf]
        %v897 = vld [vmem:[#allocation7 + $0x18] sm:$0xf]
        %v898 = vld [vmem:[#allocation7 + $0x1c] sm:$0xf]
        %v899 = vld [vmem:[#allocation7 + $0x20] sm:$0xf]
        %v900 = vld [vmem:[#allocation7 + $0x24] sm:$0xf]
        %v901 = vld [vmem:[#allocation7 + $0x28] sm:$0xf]
        %v902 = vld [vmem:[#allocation7 + $0x2c] sm:$0xf]
        %v903 = vld [vmem:[#allocation7 + $0x30] sm:$0xf]
        %v904 = vld [vmem:[#allocation7 + $0x34] sm:$0xf]
        %v905 = vld [vmem:[#allocation7 + $0x38] sm:$0xf]
        %v906 = vld [vmem:[#allocation7 + $0x3c] sm:$0xf]
        %v907 = vld [vmem:[#allocation7 + $0x40] sm:$0xf]
        %v908 = vld [vmem:[#allocation7 + $0x44] sm:$0xf]
        %v909 = vld [vmem:[#allocation7 + $0x48] sm:$0xf]
        %v910 = vld [vmem:[#allocation7 + $0x4c] sm:$0xf]
        %v911 = vld [vmem:[#allocation7 + $0x50] sm:$0xf]
        %v912 = vld [vmem:[#allocation7 + $0x54] sm:$0xf]
        %v913 = vld [vmem:[#allocation7 + $0x58] sm:$0xf]
        %v914 = vld [vmem:[#allocation7 + $0x5c] sm:$0xf]
        %v915 = vld [vmem:[#allocation7 + $0x60] sm:$0xf]
        %v916 = vld [vmem:[#allocation7 + $0x64] sm:$0xf]
        %v917 = vld [vmem:[#allocation7 + $0x68] sm:$0xf]
        %v918 = vld [vmem:[#allocation7 + $0x6c] sm:$0xf]
        %v919 = vld [vmem:[#allocation7 + $0x70] sm:$0xf]
        %v920 = vld [vmem:[#allocation7 + $0x74] sm:$0xf]
        %v921 = vld [vmem:[#allocation7 + $0x78] sm:$0xf]
        %v922 = vld [vmem:[#allocation7 + $0x7c] sm:$0xf]
        %v955 = vunpack.c.l.b16 %v891
        %v956 = vunpack.c.l.b16 %v892
        %v957 = vunpack.c.l.b16 %v893
        %v958 = vunpack.c.l.b16 %v894
        %v959 = vunpack.c.l.b16 %v895
        %v960 = vunpack.c.l.b16 %v896
        %v961 = vunpack.c.l.b16 %v897
        %v962 = vunpack.c.l.b16 %v898
        %v963 = vunpack.c.l.b16 %v899
        %v964 = vunpack.c.l.b16 %v900
        %v965 = vunpack.c.l.b16 %v901
        %v966 = vunpack.c.l.b16 %v902
        %v967 = vunpack.c.l.b16 %v903
        %v968 = vunpack.c.l.b16 %v904
        %v969 = vunpack.c.l.b16 %v905
        %v970 = vunpack.c.l.b16 %v906
        %v971 = vunpack.c.l.b16 %v907
        %v972 = vunpack.c.l.b16 %v908
        %v973 = vunpack.c.l.b16 %v909
        %v974 = vunpack.c.l.b16 %v910
        %v975 = vunpack.c.l.b16 %v911
        %v976 = vunpack.c.l.b16 %v912
        %v977 = vunpack.c.l.b16 %v913
        %v978 = vunpack.c.l.b16 %v914
        %v979 = vunpack.c.l.b16 %v915
        %v980 = vunpack.c.l.b16 %v916
        %v981 = vunpack.c.l.b16 %v917
        %v982 = vunpack.c.l.b16 %v918
        %v983 = vunpack.c.l.b16 %v919
        %v984 = vunpack.c.l.b16 %v920
        %v985 = vunpack.c.l.b16 %v921
        %v986 = vunpack.c.l.b16 %v922
        %v987 = vpack.c.b16 %v956, %v955
        %v988 = vpack.c.b16 %v958, %v957
        %v989 = vpack.c.b16 %v960, %v959
        %v990 = vpack.c.b16 %v962, %v961
        %v991 = vpack.c.b16 %v964, %v963
        %v992 = vpack.c.b16 %v966, %v965
        %v993 = vpack.c.b16 %v968, %v967
        %v994 = vpack.c.b16 %v970, %v969
        %v995 = vpack.c.b16 %v972, %v971
        %v996 = vpack.c.b16 %v974, %v973
        %v997 = vpack.c.b16 %v976, %v975
        %v998 = vpack.c.b16 %v978, %v977
        %v999 = vpack.c.b16 %v980, %v979
        %v1000 = vpack.c.b16 %v982, %v981
        %v1001 = vpack.c.b16 %v984, %v983
        %v1002 = vpack.c.b16 %v986, %v985
        %1019 = vmatprep.subr.bf16.mxu0 0
        %1020 = vmatpush1.bf16.msra.mxu0 %v987
        %1021 = vmatprep.subr.bf16.mxu0 0
        %1022 = vmatpush1.bf16.msra.mxu0 %v988
        %1023 = vmatprep.subr.bf16.mxu0 0
        %1024 = vmatpush1.bf16.msra.mxu0 %v989
        %1025 = vmatprep.subr.bf16.mxu0 0
        %1026 = vmatpush1.bf16.msra.mxu0 %v990
        %1027 = vmatprep.subr.bf16.mxu0 0
        %1028 = vmatpush1.bf16.msra.mxu0 %v991
        %1029 = vmatprep.subr.bf16.mxu0 0
        %1030 = vmatpush1.bf16.msra.mxu0 %v992
        %1031 = vmatprep.subr.bf16.mxu0 0
        %1032 = vmatpush1.bf16.msra.mxu0 %v993
        %1033 = vmatprep.subr.bf16.mxu0 0
        %1034 = vmatpush1.bf16.msra.mxu0 %v994
        %1035 = vmatprep.subr.bf16.mxu0 0
        %1036 = vmatpush1.bf16.msra.mxu0 %v995
        %1037 = vmatprep.subr.bf16.mxu0 0
        %1038 = vmatpush1.bf16.msra.mxu0 %v996
        %1039 = vmatprep.subr.bf16.mxu0 0
        %1040 = vmatpush1.bf16.msra.mxu0 %v997
        %1041 = vmatprep.subr.bf16.mxu0 0
        %1042 = vmatpush1.bf16.msra.mxu0 %v998
        %1043 = vmatprep.subr.bf16.mxu0 0
        %1044 = vmatpush1.bf16.msra.mxu0 %v999
        %1045 = vmatprep.subr.bf16.mxu0 0
        %1046 = vmatpush1.bf16.msra.mxu0 %v1000
        %1047 = vmatprep.subr.bf16.mxu0 0
        %1048 = vmatpush1.bf16.msra.mxu0 %v1001
        %1049 = vmatprep.subr.bf16.mxu0 0
        %1050 = vmatpush1.bf16.msra.mxu0 %v1002
        %1051 = vmatprep.mubr.bf16.mxu0 %v587
        %1052 = vmatmul.mubr.bf16.gmra.mrb[0].mxu0 %v586
        %v1053 = vpop.f32.mrb[0].mxu0
        %v1054 = vadd.f32 0.0, %v1053
        %v1055 = vpop.f32.mrb[0].mxu0
        %v1056 = vpop.f32.mrb[0].mxu0
        %v1057 = vadd.f32 0.0, %v1056
        %v1058 = vpop.f32.mrb[0].mxu0
        %1059 = vmatprep.mubr.bf16.mxu0 %v589
        %1060 = vmatmul.mubr.bf16.gmra.mrb[0].mxu0 %v588
        %v1061 = vpop.f32.mrb[0].mxu0
        %v1062 = vadd.f32 0.0, %v1061
        %v1063 = vpop.f32.mrb[0].mxu0
        %v1064 = vpop.f32.mrb[0].mxu0
        %v1065 = vadd.f32 0.0, %v1064
        %v1066 = vpop.f32.mrb[0].mxu0
        %1067 = vmatprep.mubr.bf16.mxu0 %v591
        %1068 = vmatmul.mubr.bf16.gmra.mrb[0].mxu0 %v590
        %v1069 = vpop.f32.mrb[0].mxu0
        %v1070 = vadd.f32 0.0, %v1069
        %v1071 = vpop.f32.mrb[0].mxu0
        %v1072 = vpop.f32.mrb[0].mxu0
        %v1073 = vadd.f32 0.0, %v1072
        %v1074 = vpop.f32.mrb[0].mxu0
        %1075 = vmatprep.mubr.bf16.mxu0 %v593
        %1076 = vmatmul.mubr.bf16.gmra.mrb[0].mxu0 %v592
        %v1077 = vpop.f32.mrb[0].mxu0
        %v1078 = vadd.f32 0.0, %v1077
        %v1079 = vpop.f32.mrb[0].mxu0
        %v1080 = vpop.f32.mrb[0].mxu0
        %v1081 = vadd.f32 0.0, %v1080
        %v1082 = vpop.f32.mrb[0].mxu0
        %1083 = vmatprep.mubr.bf16.mxu0 %v595
        %1084 = vmatmul.mubr.bf16.gmra.mrb[0].mxu0 %v594
        %v1085 = vpop.f32.mrb[0].mxu0
        %v1086 = vadd.f32 0.0, %v1085
        %v1087 = vpop.f32.mrb[0].mxu0
        %v1088 = vpop.f32.mrb[0].mxu0
        %v1089 = vadd.f32 0.0, %v1088
        %v1090 = vpop.f32.mrb[0].mxu0
        %1091 = vmatprep.mubr.bf16.mxu0 %v597
        %1092 = vmatmul.mubr.bf16.gmra.mrb[0].mxu0 %v596
        %v1093 = vpop.f32.mrb[0].mxu0
        %v1094 = vadd.f32 0.0, %v1093
        %v1095 = vpop.f32.mrb[0].mxu0
        %v1096 = vpop.f32.mrb[0].mxu0
        %v1097 = vadd.f32 0.0, %v1096
        %v1098 = vpop.f32.mrb[0].mxu0
        %1099 = vmatprep.mubr.bf16.mxu0 %v599
        %1100 = vmatmul.mubr.bf16.gmra.mrb[0].mxu0 %v598
        %v1101 = vpop.f32.mrb[0].mxu0
        %v1102 = vadd.f32 0.0, %v1101
        %v1103 = vpop.f32.mrb[0].mxu0
        %v1104 = vpop.f32.mrb[0].mxu0
        %v1105 = vadd.f32 0.0, %v1104
        %v1106 = vpop.f32.mrb[0].mxu0
        %1107 = vmatprep.mubr.bf16.mxu0 %v601
        %1108 = vmatmul.mubr.bf16.gmra.mrb[0].mxu0 %v600
        %v1109 = vpop.f32.mrb[0].mxu0
        %v1110 = vadd.f32 0.0, %v1109
        %v1111 = vpop.f32.mrb[0].mxu0
        %v1112 = vpop.f32.mrb[0].mxu0
        %v1113 = vadd.f32 0.0, %v1112
        %v1114 = vpop.f32.mrb[0].mxu0
        %1115 = vdwg.mxu0
        %v1116 = vld [vmem:[#allocation8] sm:$0xf]
        %v1117 = vld [vmem:[#allocation8 + $0x4] sm:$0xf]
        %v1118 = vld [vmem:[#allocation8 + $0x8] sm:$0xf]
        %v1119 = vld [vmem:[#allocation8 + $0xc] sm:$0xf]
        %v1120 = vld [vmem:[#allocation8 + $0x10] sm:$0xf]
        %v1121 = vld [vmem:[#allocation8 + $0x14] sm:$0xf]
        %v1122 = vld [vmem:[#allocation8 + $0x18] sm:$0xf]
        %v1123 = vld [vmem:[#allocation8 + $0x1c] sm:$0xf]
        %v1124 = vld [vmem:[#allocation8 + $0x20] sm:$0xf]
        %v1125 = vld [vmem:[#allocation8 + $0x24] sm:$0xf]
        %v1126 = vld [vmem:[#allocation8 + $0x28] sm:$0xf]
        %v1127 = vld [vmem:[#allocation8 + $0x2c] sm:$0xf]
        %v1128 = vld [vmem:[#allocation8 + $0x30] sm:$0xf]
        %v1129 = vld [vmem:[#allocation8 + $0x34] sm:$0xf]
        %v1130 = vld [vmem:[#allocation8 + $0x38] sm:$0xf]
        %v1131 = vld [vmem:[#allocation8 + $0x3c] sm:$0xf]
        %v1132 = vld [vmem:[#allocation8 + $0x40] sm:$0xf]
        %v1133 = vld [vmem:[#allocation8 + $0x44] sm:$0xf]
        %v1134 = vld [vmem:[#allocation8 + $0x48] sm:$0xf]
        %v1135 = vld [vmem:[#allocation8 + $0x4c] sm:$0xf]
        %v1136 = vld [vmem:[#allocation8 + $0x50] sm:$0xf]
        %v1137 = vld [vmem:[#allocation8 + $0x54] sm:$0xf]
        %v1138 = vld [vmem:[#allocation8 + $0x58] sm:$0xf]
        %v1139 = vld [vmem:[#allocation8 + $0x5c] sm:$0xf]
        %v1140 = vld [vmem:[#allocation8 + $0x60] sm:$0xf]
        %v1141 = vld [vmem:[#allocation8 + $0x64] sm:$0xf]
        %v1142 = vld [vmem:[#allocation8 + $0x68] sm:$0xf]
        %v1143 = vld [vmem:[#allocation8 + $0x6c] sm:$0xf]
        %v1144 = vld [vmem:[#allocation8 + $0x70] sm:$0xf]
        %v1145 = vld [vmem:[#allocation8 + $0x74] sm:$0xf]
        %v1146 = vld [vmem:[#allocation8 + $0x78] sm:$0xf]
        %v1147 = vld [vmem:[#allocation8 + $0x7c] sm:$0xf]
        %v1180 = vunpack.c.l.b16 %v1116
        %v1181 = vunpack.c.l.b16 %v1117
        %v1182 = vunpack.c.l.b16 %v1118
        %v1183 = vunpack.c.l.b16 %v1119
        %v1184 = vunpack.c.l.b16 %v1120
        %v1185 = vunpack.c.l.b16 %v1121
        %v1186 = vunpack.c.l.b16 %v1122
        %v1187 = vunpack.c.l.b16 %v1123
        %v1188 = vunpack.c.l.b16 %v1124
        %v1189 = vunpack.c.l.b16 %v1125
        %v1190 = vunpack.c.l.b16 %v1126
        %v1191 = vunpack.c.l.b16 %v1127
        %v1192 = vunpack.c.l.b16 %v1128
        %v1193 = vunpack.c.l.b16 %v1129
        %v1194 = vunpack.c.l.b16 %v1130
        %v1195 = vunpack.c.l.b16 %v1131
        %v1196 = vunpack.c.l.b16 %v1132
        %v1197 = vunpack.c.l.b16 %v1133
        %v1198 = vunpack.c.l.b16 %v1134
        %v1199 = vunpack.c.l.b16 %v1135
        %v1200 = vunpack.c.l.b16 %v1136
        %v1201 = vunpack.c.l.b16 %v1137
        %v1202 = vunpack.c.l.b16 %v1138
        %v1203 = vunpack.c.l.b16 %v1139
        %v1204 = vunpack.c.l.b16 %v1140
        %v1205 = vunpack.c.l.b16 %v1141
        %v1206 = vunpack.c.l.b16 %v1142
        %v1207 = vunpack.c.l.b16 %v1143
        %v1208 = vunpack.c.l.b16 %v1144
        %v1209 = vunpack.c.l.b16 %v1145
        %v1210 = vunpack.c.l.b16 %v1146
        %v1211 = vunpack.c.l.b16 %v1147
        %v1212 = vpack.c.b16 %v1181, %v1180
        %v1213 = vpack.c.b16 %v1183, %v1182
        %v1214 = vpack.c.b16 %v1185, %v1184
        %v1215 = vpack.c.b16 %v1187, %v1186
        %v1216 = vpack.c.b16 %v1189, %v1188
        %v1217 = vpack.c.b16 %v1191, %v1190
        %v1218 = vpack.c.b16 %v1193, %v1192
        %v1219 = vpack.c.b16 %v1195, %v1194
        %v1220 = vpack.c.b16 %v1197, %v1196
        %v1221 = vpack.c.b16 %v1199, %v1198
        %v1222 = vpack.c.b16 %v1201, %v1200
        %v1223 = vpack.c.b16 %v1203, %v1202
        %v1224 = vpack.c.b16 %v1205, %v1204
        %v1225 = vpack.c.b16 %v1207, %v1206
        %v1226 = vpack.c.b16 %v1209, %v1208
        %v1227 = vpack.c.b16 %v1211, %v1210
        %1244 = vmatprep.subr.bf16.mxu0 0
        %1245 = vmatpush1.bf16.msra.mxu0 %v1212
        %1246 = vmatprep.subr.bf16.mxu0 0
        %1247 = vmatpush1.bf16.msra.mxu0 %v1213
        %1248 = vmatprep.subr.bf16.mxu0 0
        %1249 = vmatpush1.bf16.msra.mxu0 %v1214
        %1250 = vmatprep.subr.bf16.mxu0 0
        %1251 = vmatpush1.bf16.msra.mxu0 %v1215
        %1252 = vmatprep.subr.bf16.mxu0 0
        %1253 = vmatpush1.bf16.msra.mxu0 %v1216
        %1254 = vmatprep.subr.bf16.mxu0 0
        %1255 = vmatpush1.bf16.msra.mxu0 %v1217
        %1256 = vmatprep.subr.bf16.mxu0 0
        %1257 = vmatpush1.bf16.msra.mxu0 %v1218
        %1258 = vmatprep.subr.bf16.mxu0 0
        %1259 = vmatpush1.bf16.msra.mxu0 %v1219
        %1260 = vmatprep.subr.bf16.mxu0 0
        %1261 = vmatpush1.bf16.msra.mxu0 %v1220
        %1262 = vmatprep.subr.bf16.mxu0 0
        %1263 = vmatpush1.bf16.msra.mxu0 %v1221
        %1264 = vmatprep.subr.bf16.mxu0 0
        %1265 = vmatpush1.bf16.msra.mxu0 %v1222
        %1266 = vmatprep.subr.bf16.mxu0 0
        %1267 = vmatpush1.bf16.msra.mxu0 %v1223
        %1268 = vmatprep.subr.bf16.mxu0 0
        %1269 = vmatpush1.bf16.msra.mxu0 %v1224
        %1270 = vmatprep.subr.bf16.mxu0 0
        %1271 = vmatpush1.bf16.msra.mxu0 %v1225
        %1272 = vmatprep.subr.bf16.mxu0 0
        %1273 = vmatpush1.bf16.msra.mxu0 %v1226
        %1274 = vmatprep.subr.bf16.mxu0 0
        %1275 = vmatpush1.bf16.msra.mxu0 %v1227
        %1276 = vmatprep.mubr.bf16.mxu0 %v587
        %1277 = vmatmul.mubr.bf16.gmra.mrb[0].mxu0 %v586
        %v1278 = vpop.f32.mrb[0].mxu0
        %v1279 = vadd.f32 0.0, %v1278
        %v1280 = vpop.f32.mrb[0].mxu0
        %v1281 = vpop.f32.mrb[0].mxu0
        %v1282 = vadd.f32 0.0, %v1281
        %v1283 = vpop.f32.mrb[0].mxu0
        %1284 = vmatprep.mubr.bf16.mxu0 %v589
        %1285 = vmatmul.mubr.bf16.gmra.mrb[0].mxu0 %v588
        %v1286 = vpop.f32.mrb[0].mxu0
        %v1287 = vadd.f32 0.0, %v1286
        %v1288 = vpop.f32.mrb[0].mxu0
        %v1289 = vpop.f32.mrb[0].mxu0
        %v1290 = vadd.f32 0.0, %v1289
        %v1291 = vpop.f32.mrb[0].mxu0
        %1292 = vmatprep.mubr.bf16.mxu0 %v591
        %1293 = vmatmul.mubr.bf16.gmra.mrb[0].mxu0 %v590
        %v1294 = vpop.f32.mrb[0].mxu0
        %v1295 = vadd.f32 0.0, %v1294
        %v1296 = vpop.f32.mrb[0].mxu0
        %v1297 = vpop.f32.mrb[0].mxu0
        %v1298 = vadd.f32 0.0, %v1297
        %v1299 = vpop.f32.mrb[0].mxu0
        %1300 = vmatprep.mubr.bf16.mxu0 %v593
        %1301 = vmatmul.mubr.bf16.gmra.mrb[0].mxu0 %v592
        %v1302 = vpop.f32.mrb[0].mxu0
        %v1303 = vadd.f32 0.0, %v1302
        %v1304 = vpop.f32.mrb[0].mxu0
        %v1305 = vpop.f32.mrb[0].mxu0
        %v1306 = vadd.f32 0.0, %v1305
        %v1307 = vpop.f32.mrb[0].mxu0
        %1308 = vmatprep.mubr.bf16.mxu0 %v595
        %1309 = vmatmul.mubr.bf16.gmra.mrb[0].mxu0 %v594
        %v1310 = vpop.f32.mrb[0].mxu0
        %v1311 = vadd.f32 0.0, %v1310
        %v1312 = vpop.f32.mrb[0].mxu0
        %v1313 = vpop.f32.mrb[0].mxu0
        %v1314 = vadd.f32 0.0, %v1313
        %v1315 = vpop.f32.mrb[0].mxu0
        %1316 = vmatprep.mubr.bf16.mxu0 %v597
        %1317 = vmatmul.mubr.bf16.gmra.mrb[0].mxu0 %v596
        %v1318 = vpop.f32.mrb[0].mxu0
        %v1319 = vadd.f32 0.0, %v1318
        %v1320 = vpop.f32.mrb[0].mxu0
        %v1321 = vpop.f32.mrb[0].mxu0
        %v1322 = vadd.f32 0.0, %v1321
        %v1323 = vpop.f32.mrb[0].mxu0
        %1324 = vmatprep.mubr.bf16.mxu0 %v599
        %1325 = vmatmul.mubr.bf16.gmra.mrb[0].mxu0 %v598
        %v1326 = vpop.f32.mrb[0].mxu0
        %v1327 = vadd.f32 0.0, %v1326
        %v1328 = vpop.f32.mrb[0].mxu0
        %v1329 = vpop.f32.mrb[0].mxu0
        %v1330 = vadd.f32 0.0, %v1329
        %v1331 = vpop.f32.mrb[0].mxu0
        %1332 = vmatprep.mubr.bf16.mxu0 %v601
        %1333 = vmatmul.mubr.bf16.gmra.mrb[0].mxu0 %v600
        %v1334 = vpop.f32.mrb[0].mxu0
        %v1335 = vadd.f32 0.0, %v1334
        %v1336 = vpop.f32.mrb[0].mxu0
        %v1337 = vpop.f32.mrb[0].mxu0
        %v1338 = vadd.f32 0.0, %v1337
        %v1339 = vpop.f32.mrb[0].mxu0
        %1340 = vdwg.mxu0
        %v1341 = vld [vmem:[%s421] sm:$0xff]
        %v1342 = vld [vmem:[%s421 + $0x8] sm:$0xff]
        %v1343 = vld [vmem:[%s421 + $0x10] sm:$0xff]
        %v1344 = vld [vmem:[%s421 + $0x18] sm:$0xff]
        %v1345 = vld [vmem:[%s421 + $0x20] sm:$0xff]
        %v1346 = vld [vmem:[%s421 + $0x28] sm:$0xff]
        %v1347 = vld [vmem:[%s421 + $0x30] sm:$0xff]
        %v1348 = vld [vmem:[%s421 + $0x38] sm:$0xff]
        %v1349 = vld [vmem:[%s421 + $0x40] sm:$0xff]
        %v1350 = vld [vmem:[%s421 + $0x48] sm:$0xff]
        %v1351 = vld [vmem:[%s421 + $0x50] sm:$0xff]
        %v1352 = vld [vmem:[%s421 + $0x58] sm:$0xff]
        %v1353 = vld [vmem:[%s421 + $0x60] sm:$0xff]
        %v1354 = vld [vmem:[%s421 + $0x68] sm:$0xff]
        %v1355 = vld [vmem:[%s421 + $0x70] sm:$0xff]
        %v1356 = vld [vmem:[%s421 + $0x78] sm:$0xff]
        %v1357 = vld [vmem:[%s430] sm:$0xff]
        %v1358 = vld [vmem:[%s430 + $0x8] sm:$0xff]
        %v1359 = vld [vmem:[%s430 + $0x10] sm:$0xff]
        %v1360 = vld [vmem:[%s430 + $0x18] sm:$0xff]
        %v1361 = vld [vmem:[%s430 + $0x20] sm:$0xff]
        %v1362 = vld [vmem:[%s430 + $0x28] sm:$0xff]
        %v1363 = vld [vmem:[%s430 + $0x30] sm:$0xff]
        %v1364 = vld [vmem:[%s430 + $0x38] sm:$0xff]
        %v1365 = vld [vmem:[%s430 + $0x40] sm:$0xff]
        %v1366 = vld [vmem:[%s430 + $0x48] sm:$0xff]
        %v1367 = vld [vmem:[%s430 + $0x50] sm:$0xff]
        %v1368 = vld [vmem:[%s430 + $0x58] sm:$0xff]
        %v1369 = vld [vmem:[%s430 + $0x60] sm:$0xff]
        %v1370 = vld [vmem:[%s430 + $0x68] sm:$0xff]
        %v1371 = vld [vmem:[%s430 + $0x70] sm:$0xff]
        %v1372 = vld [vmem:[%s430 + $0x78] sm:$0xff]
        %v1373 = vmul.f32 %v813, %v1341
        %v1374 = vmul.f32 %v817, %v1342
        %v1375 = vmul.f32 %v823, %v1343
        %v1376 = vmul.f32 %v827, %v1344
        %v1377 = vmul.f32 %v833, %v1345
        %v1378 = vmul.f32 %v837, %v1346
        %v1379 = vmul.f32 %v843, %v1347
        %v1380 = vmul.f32 %v847, %v1348
        %v1381 = vmul.f32 %v853, %v1349
        %v1382 = vmul.f32 %v857, %v1350
        %v1383 = vmul.f32 %v863, %v1351
        %v1384 = vmul.f32 %v867, %v1352
        %v1385 = vmul.f32 %v873, %v1353
        %v1386 = vmul.f32 %v877, %v1354
        %v1387 = vmul.f32 %v883, %v1355
        %v1388 = vmul.f32 %v887, %v1356
        %1389 = vrot.lane.b32.xlu0 %v813, 64
        %v1390 = vpop.permute.xlu0 %1389
        %1391 = vrot.lane.b32.xlu0 %v817, 64
        %v1392 = vpop.permute.xlu0 %1391
        %1393 = vrot.lane.b32.xlu0 %v823, 64
        %v1394 = vpop.permute.xlu0 %1393
        %1395 = vrot.lane.b32.xlu0 %v827, 64
        %v1396 = vpop.permute.xlu0 %1395
        %1397 = vrot.lane.b32.xlu0 %v833, 64
        %v1398 = vpop.permute.xlu0 %1397
        %1399 = vrot.lane.b32.xlu0 %v837, 64
        %v1400 = vpop.permute.xlu0 %1399
        %1401 = vrot.lane.b32.xlu0 %v843, 64
        %v1402 = vpop.permute.xlu0 %1401
        %1403 = vrot.lane.b32.xlu0 %v847, 64
        %v1404 = vpop.permute.xlu0 %1403
        %1405 = vrot.lane.b32.xlu0 %v853, 64
        %v1406 = vpop.permute.xlu0 %1405
        %1407 = vrot.lane.b32.xlu0 %v857, 64
        %v1408 = vpop.permute.xlu0 %1407
        %1409 = vrot.lane.b32.xlu0 %v863, 64
        %v1410 = vpop.permute.xlu0 %1409
        %1411 = vrot.lane.b32.xlu0 %v867, 64
        %v1412 = vpop.permute.xlu0 %1411
        %1413 = vrot.lane.b32.xlu0 %v873, 64
        %v1414 = vpop.permute.xlu0 %1413
        %1415 = vrot.lane.b32.xlu0 %v877, 64
        %v1416 = vpop.permute.xlu0 %1415
        %1417 = vrot.lane.b32.xlu0 %v883, 64
        %v1418 = vpop.permute.xlu0 %1417
        %1419 = vrot.lane.b32.xlu0 %v887, 64
        %v1420 = vpop.permute.xlu0 %1419
        %v1421 = vmul.f32 %v1390, %v1357
        %v1422 = vmul.f32 %v1392, %v1358
        %v1423 = vmul.f32 %v1394, %v1359
        %v1424 = vmul.f32 %v1396, %v1360
        %v1425 = vmul.f32 %v1398, %v1361
        %v1426 = vmul.f32 %v1400, %v1362
        %v1427 = vmul.f32 %v1402, %v1363
        %v1428 = vmul.f32 %v1404, %v1364
        %v1429 = vmul.f32 %v1406, %v1365
        %v1430 = vmul.f32 %v1408, %v1366
        %v1431 = vmul.f32 %v1410, %v1367
        %v1432 = vmul.f32 %v1412, %v1368
        %v1433 = vmul.f32 %v1414, %v1369
        %v1434 = vmul.f32 %v1416, %v1370
        %v1435 = vmul.f32 %v1418, %v1371
        %v1436 = vmul.f32 %v1420, %v1372
        %v1437 = vadd.f32 %v1373, %v1421
        %v1438 = vadd.f32 %v1374, %v1422
        %v1439 = vadd.f32 %v1375, %v1423
        %v1440 = vadd.f32 %v1376, %v1424
        %v1441 = vadd.f32 %v1377, %v1425
        %v1442 = vadd.f32 %v1378, %v1426
        %v1443 = vadd.f32 %v1379, %v1427
        %v1444 = vadd.f32 %v1380, %v1428
        %v1445 = vadd.f32 %v1381, %v1429
        %v1446 = vadd.f32 %v1382, %v1430
        %v1447 = vadd.f32 %v1383, %v1431
        %v1448 = vadd.f32 %v1384, %v1432
        %v1449 = vadd.f32 %v1385, %v1433
        %v1450 = vadd.f32 %v1386, %v1434
        %v1451 = vadd.f32 %v1387, %v1435
        %v1452 = vadd.f32 %v1388, %v1436
        %v1453 = vmul.f32 %v1437, 0.088388346
        %v1454 = vmul.f32 %v1438, 0.088388346
        %v1455 = vmul.f32 %v1439, 0.088388346
        %v1456 = vmul.f32 %v1440, 0.088388346
        %v1457 = vmul.f32 %v1441, 0.088388346
        %v1458 = vmul.f32 %v1442, 0.088388346
        %v1459 = vmul.f32 %v1443, 0.088388346
        %v1460 = vmul.f32 %v1444, 0.088388346
        %v1461 = vmul.f32 %v1445, 0.088388346
        %v1462 = vmul.f32 %v1446, 0.088388346
        %v1463 = vmul.f32 %v1447, 0.088388346
        %v1464 = vmul.f32 %v1448, 0.088388346
        %v1465 = vmul.f32 %v1449, 0.088388346
        %v1466 = vmul.f32 %v1450, 0.088388346
        %v1467 = vmul.f32 %v1451, 0.088388346
        %v1468 = vmul.f32 %v1452, 0.088388346
        %v1469 = vpack.c.bf16 %v1454, %v1453
        %v1470 = vpack.c.bf16 %v1456, %v1455
        %v1471 = vpack.c.bf16 %v1458, %v1457
        %v1472 = vpack.c.bf16 %v1460, %v1459
        %v1473 = vpack.c.bf16 %v1462, %v1461
        %v1474 = vpack.c.bf16 %v1464, %v1463
        %v1475 = vpack.c.bf16 %v1466, %v1465
        %v1476 = vpack.c.bf16 %v1468, %v1467
        %v1485 = vunpack.c.l.b16 %v1469
        %v1486 = vunpack.c.h.b16 %v1469
        %v1487 = vunpack.c.l.b16 %v1470
        %v1488 = vunpack.c.h.b16 %v1470
        %v1489 = vunpack.c.l.b16 %v1471
        %v1490 = vunpack.c.h.b16 %v1471
        %v1491 = vunpack.c.l.b16 %v1472
        %v1492 = vunpack.c.h.b16 %v1472
        %v1493 = vunpack.c.l.b16 %v1473
        %v1494 = vunpack.c.h.b16 %v1473
        %v1495 = vunpack.c.l.b16 %v1474
        %v1496 = vunpack.c.h.b16 %v1474
        %v1497 = vunpack.c.l.b16 %v1475
        %v1498 = vunpack.c.h.b16 %v1475
        %v1499 = vunpack.c.l.b16 %v1476
        %v1500 = vunpack.c.h.b16 %v1476
        %v1501 = vpack.c.b16 %v1485, %v1485
        %v1502 = vpack.c.b16 %v1486, %v1486
        %v1503 = vpack.c.b16 %v1487, %v1487
        %v1504 = vpack.c.b16 %v1488, %v1488
        %v1505 = vpack.c.b16 %v1489, %v1489
        %v1506 = vpack.c.b16 %v1490, %v1490
        %v1507 = vpack.c.b16 %v1491, %v1491
        %v1508 = vpack.c.b16 %v1492, %v1492
        %v1509 = vpack.c.b16 %v1493, %v1493
        %v1510 = vpack.c.b16 %v1494, %v1494
        %v1511 = vpack.c.b16 %v1495, %v1495
        %v1512 = vpack.c.b16 %v1496, %v1496
        %v1513 = vpack.c.b16 %v1497, %v1497
        %v1514 = vpack.c.b16 %v1498, %v1498
        %v1515 = vpack.c.b16 %v1499, %v1499
        %v1516 = vpack.c.b16 %v1500, %v1500
        %1533 = vst [vmem:[%s468] sm:$0xf] %v1501
        %1534 = vst [vmem:[%s468 + $0x8] sm:$0xf] %v1502
        %1535 = vst [vmem:[%s468 + $0x10] sm:$0xf] %v1503
        %1536 = vst [vmem:[%s468 + $0x18] sm:$0xf] %v1504
        %1537 = vst [vmem:[%s468 + $0x20] sm:$0xf] %v1505
        %1538 = vst [vmem:[%s468 + $0x28] sm:$0xf] %v1506
        %1539 = vst [vmem:[%s468 + $0x30] sm:$0xf] %v1507
        %1540 = vst [vmem:[%s468 + $0x38] sm:$0xf] %v1508
        %1541 = vst [vmem:[%s468 + $0x40] sm:$0xf] %v1509
        %1542 = vst [vmem:[%s468 + $0x48] sm:$0xf] %v1510
        %1543 = vst [vmem:[%s468 + $0x50] sm:$0xf] %v1511
        %1544 = vst [vmem:[%s468 + $0x58] sm:$0xf] %v1512
        %1545 = vst [vmem:[%s468 + $0x60] sm:$0xf] %v1513
        %1546 = vst [vmem:[%s468 + $0x68] sm:$0xf] %v1514
        %1547 = vst [vmem:[%s468 + $0x70] sm:$0xf] %v1515
        %1548 = vst [vmem:[%s468 + $0x78] sm:$0xf] %v1516
        %v1549 = vmul.f32 %v815, %v1341
        %v1550 = vmul.f32 %v819, %v1342
        %v1551 = vmul.f32 %v825, %v1343
        %v1552 = vmul.f32 %v829, %v1344
        %v1553 = vmul.f32 %v835, %v1345
        %v1554 = vmul.f32 %v839, %v1346
        %v1555 = vmul.f32 %v845, %v1347
        %v1556 = vmul.f32 %v849, %v1348
        %v1557 = vmul.f32 %v855, %v1349
        %v1558 = vmul.f32 %v859, %v1350
        %v1559 = vmul.f32 %v865, %v1351
        %v1560 = vmul.f32 %v869, %v1352
        %v1561 = vmul.f32 %v875, %v1353
        %v1562 = vmul.f32 %v879, %v1354
        %v1563 = vmul.f32 %v885, %v1355
        %v1564 = vmul.f32 %v889, %v1356
        %1565 = vrot.lane.b32.xlu0 %v815, 64
        %v1566 = vpop.permute.xlu0 %1565
        %1567 = vrot.lane.b32.xlu0 %v819, 64
        %v1568 = vpop.permute.xlu0 %1567
        %1569 = vrot.lane.b32.xlu0 %v825, 64
        %v1570 = vpop.permute.xlu0 %1569
        %1571 = vrot.lane.b32.xlu0 %v829, 64
        %v1572 = vpop.permute.xlu0 %1571
        %1573 = vrot.lane.b32.xlu0 %v835, 64
        %v1574 = vpop.permute.xlu0 %1573
        %1575 = vrot.lane.b32.xlu0 %v839, 64
        %v1576 = vpop.permute.xlu0 %1575
        %1577 = vrot.lane.b32.xlu0 %v845, 64
        %v1578 = vpop.permute.xlu0 %1577
        %1579 = vrot.lane.b32.xlu0 %v849, 64
        %v1580 = vpop.permute.xlu0 %1579
        %1581 = vrot.lane.b32.xlu0 %v855, 64
        %v1582 = vpop.permute.xlu0 %1581
        %1583 = vrot.lane.b32.xlu0 %v859, 64
        %v1584 = vpop.permute.xlu0 %1583
        %1585 = vrot.lane.b32.xlu0 %v865, 64
        %v1586 = vpop.permute.xlu0 %1585
        %1587 = vrot.lane.b32.xlu0 %v869, 64
        %v1588 = vpop.permute.xlu0 %1587
        %1589 = vrot.lane.b32.xlu0 %v875, 64
        %v1590 = vpop.permute.xlu0 %1589
        %1591 = vrot.lane.b32.xlu0 %v879, 64
        %v1592 = vpop.permute.xlu0 %1591
        %1593 = vrot.lane.b32.xlu0 %v885, 64
        %v1594 = vpop.permute.xlu0 %1593
        %1595 = vrot.lane.b32.xlu0 %v889, 64
        %v1596 = vpop.permute.xlu0 %1595
        %v1597 = vmul.f32 %v1566, %v1357
        %v1598 = vmul.f32 %v1568, %v1358
        %v1599 = vmul.f32 %v1570, %v1359
        %v1600 = vmul.f32 %v1572, %v1360
        %v1601 = vmul.f32 %v1574, %v1361
        %v1602 = vmul.f32 %v1576, %v1362
        %v1603 = vmul.f32 %v1578, %v1363
        %v1604 = vmul.f32 %v1580, %v1364
        %v1605 = vmul.f32 %v1582, %v1365
        %v1606 = vmul.f32 %v1584, %v1366
        %v1607 = vmul.f32 %v1586, %v1367
        %v1608 = vmul.f32 %v1588, %v1368
        %v1609 = vmul.f32 %v1590, %v1369
        %v1610 = vmul.f32 %v1592, %v1370
        %v1611 = vmul.f32 %v1594, %v1371
        %v1612 = vmul.f32 %v1596, %v1372
        %v1613 = vadd.f32 %v1549, %v1597
        %v1614 = vadd.f32 %v1550, %v1598
        %v1615 = vadd.f32 %v1551, %v1599
        %v1616 = vadd.f32 %v1552, %v1600
        %v1617 = vadd.f32 %v1553, %v1601
        %v1618 = vadd.f32 %v1554, %v1602
        %v1619 = vadd.f32 %v1555, %v1603
        %v1620 = vadd.f32 %v1556, %v1604
        %v1621 = vadd.f32 %v1557, %v1605
        %v1622 = vadd.f32 %v1558, %v1606
        %v1623 = vadd.f32 %v1559, %v1607
        %v1624 = vadd.f32 %v1560, %v1608
        %v1625 = vadd.f32 %v1561, %v1609
        %v1626 = vadd.f32 %v1562, %v1610
        %v1627 = vadd.f32 %v1563, %v1611
        %v1628 = vadd.f32 %v1564, %v1612
        %v1629 = vmul.f32 %v1613, 0.088388346
        %v1630 = vmul.f32 %v1614, 0.088388346
        %v1631 = vmul.f32 %v1615, 0.088388346
        %v1632 = vmul.f32 %v1616, 0.088388346
        %v1633 = vmul.f32 %v1617, 0.088388346
        %v1634 = vmul.f32 %v1618, 0.088388346
        %v1635 = vmul.f32 %v1619, 0.088388346
        %v1636 = vmul.f32 %v1620, 0.088388346
        %v1637 = vmul.f32 %v1621, 0.088388346
        %v1638 = vmul.f32 %v1622, 0.088388346
        %v1639 = vmul.f32 %v1623, 0.088388346
        %v1640 = vmul.f32 %v1624, 0.088388346
        %v1641 = vmul.f32 %v1625, 0.088388346
        %v1642 = vmul.f32 %v1626, 0.088388346
        %v1643 = vmul.f32 %v1627, 0.088388346
        %v1644 = vmul.f32 %v1628, 0.088388346
        %v1645 = vpack.c.bf16 %v1630, %v1629
        %v1646 = vpack.c.bf16 %v1632, %v1631
        %v1647 = vpack.c.bf16 %v1634, %v1633
        %v1648 = vpack.c.bf16 %v1636, %v1635
        %v1649 = vpack.c.bf16 %v1638, %v1637
        %v1650 = vpack.c.bf16 %v1640, %v1639
        %v1651 = vpack.c.bf16 %v1642, %v1641
        %v1652 = vpack.c.bf16 %v1644, %v1643
        %v1661 = vunpack.c.l.b16 %v1645
        %v1662 = vunpack.c.h.b16 %v1645
        %v1663 = vunpack.c.l.b16 %v1646
        %v1664 = vunpack.c.h.b16 %v1646
        %v1665 = vunpack.c.l.b16 %v1647
        %v1666 = vunpack.c.h.b16 %v1647
        %v1667 = vunpack.c.l.b16 %v1648
        %v1668 = vunpack.c.h.b16 %v1648
        %v1669 = vunpack.c.l.b16 %v1649
        %v1670 = vunpack.c.h.b16 %v1649
        %v1671 = vunpack.c.l.b16 %v1650
        %v1672 = vunpack.c.h.b16 %v1650
        %v1673 = vunpack.c.l.b16 %v1651
        %v1674 = vunpack.c.h.b16 %v1651
        %v1675 = vunpack.c.l.b16 %v1652
        %v1676 = vunpack.c.h.b16 %v1652
        %v1677 = vpack.c.b16 %v1661, %v1661
        %v1678 = vpack.c.b16 %v1662, %v1662
        %v1679 = vpack.c.b16 %v1663, %v1663
        %v1680 = vpack.c.b16 %v1664, %v1664
        %v1681 = vpack.c.b16 %v1665, %v1665
        %v1682 = vpack.c.b16 %v1666, %v1666
        %v1683 = vpack.c.b16 %v1667, %v1667
        %v1684 = vpack.c.b16 %v1668, %v1668
        %v1685 = vpack.c.b16 %v1669, %v1669
        %v1686 = vpack.c.b16 %v1670, %v1670
        %v1687 = vpack.c.b16 %v1671, %v1671
        %v1688 = vpack.c.b16 %v1672, %v1672
        %v1689 = vpack.c.b16 %v1673, %v1673
        %v1690 = vpack.c.b16 %v1674, %v1674
        %v1691 = vpack.c.b16 %v1675, %v1675
        %v1692 = vpack.c.b16 %v1676, %v1676
        %1709 = vst [vmem:[%s468 + $0x4] sm:$0xf] %v1677
        %1710 = vst [vmem:[%s468 + $0xc] sm:$0xf] %v1678
        %1711 = vst [vmem:[%s468 + $0x14] sm:$0xf] %v1679
        %1712 = vst [vmem:[%s468 + $0x1c] sm:$0xf] %v1680
        %1713 = vst [vmem:[%s468 + $0x24] sm:$0xf] %v1681
        %1714 = vst [vmem:[%s468 + $0x2c] sm:$0xf] %v1682
        %1715 = vst [vmem:[%s468 + $0x34] sm:$0xf] %v1683
        %1716 = vst [vmem:[%s468 + $0x3c] sm:$0xf] %v1684
        %1717 = vst [vmem:[%s468 + $0x44] sm:$0xf] %v1685
        %1718 = vst [vmem:[%s468 + $0x4c] sm:$0xf] %v1686
        %1719 = vst [vmem:[%s468 + $0x54] sm:$0xf] %v1687
        %1720 = vst [vmem:[%s468 + $0x5c] sm:$0xf] %v1688
        %1721 = vst [vmem:[%s468 + $0x64] sm:$0xf] %v1689
        %1722 = vst [vmem:[%s468 + $0x6c] sm:$0xf] %v1690
        %1723 = vst [vmem:[%s468 + $0x74] sm:$0xf] %v1691
        %1724 = vst [vmem:[%s468 + $0x7c] sm:$0xf] %v1692
        %v1725 = vmul.f32 %v1054, %v1341
        %v1726 = vmul.f32 %v1057, %v1342
        %v1727 = vmul.f32 %v1062, %v1343
        %v1728 = vmul.f32 %v1065, %v1344
        %v1729 = vmul.f32 %v1070, %v1345
        %v1730 = vmul.f32 %v1073, %v1346
        %v1731 = vmul.f32 %v1078, %v1347
        %v1732 = vmul.f32 %v1081, %v1348
        %v1733 = vmul.f32 %v1086, %v1349
        %v1734 = vmul.f32 %v1089, %v1350
        %v1735 = vmul.f32 %v1094, %v1351
        %v1736 = vmul.f32 %v1097, %v1352
        %v1737 = vmul.f32 %v1102, %v1353
        %v1738 = vmul.f32 %v1105, %v1354
        %v1739 = vmul.f32 %v1110, %v1355
        %v1740 = vmul.f32 %v1113, %v1356
        %1741 = vrot.lane.b32.xlu0 %v1054, 64
        %v1742 = vpop.permute.xlu0 %1741
        %1743 = vrot.lane.b32.xlu0 %v1057, 64
        %v1744 = vpop.permute.xlu0 %1743
        %1745 = vrot.lane.b32.xlu0 %v1062, 64
        %v1746 = vpop.permute.xlu0 %1745
        %1747 = vrot.lane.b32.xlu0 %v1065, 64
        %v1748 = vpop.permute.xlu0 %1747
        %1749 = vrot.lane.b32.xlu0 %v1070, 64
        %v1750 = vpop.permute.xlu0 %1749
        %1751 = vrot.lane.b32.xlu0 %v1073, 64
        %v1752 = vpop.permute.xlu0 %1751
        %1753 = vrot.lane.b32.xlu0 %v1078, 64
        %v1754 = vpop.permute.xlu0 %1753
        %1755 = vrot.lane.b32.xlu0 %v1081, 64
        %v1756 = vpop.permute.xlu0 %1755
        %1757 = vrot.lane.b32.xlu0 %v1086, 64
        %v1758 = vpop.permute.xlu0 %1757
        %1759 = vrot.lane.b32.xlu0 %v1089, 64
        %v1760 = vpop.permute.xlu0 %1759
        %1761 = vrot.lane.b32.xlu0 %v1094, 64
        %v1762 = vpop.permute.xlu0 %1761
        %1763 = vrot.lane.b32.xlu0 %v1097, 64
        %v1764 = vpop.permute.xlu0 %1763
        %1765 = vrot.lane.b32.xlu0 %v1102, 64
        %v1766 = vpop.permute.xlu0 %1765
        %1767 = vrot.lane.b32.xlu0 %v1105, 64
        %v1768 = vpop.permute.xlu0 %1767
        %1769 = vrot.lane.b32.xlu0 %v1110, 64
        %v1770 = vpop.permute.xlu0 %1769
        %1771 = vrot.lane.b32.xlu0 %v1113, 64
        %v1772 = vpop.permute.xlu0 %1771
        %v1773 = vmul.f32 %v1742, %v1357
        %v1774 = vmul.f32 %v1744, %v1358
        %v1775 = vmul.f32 %v1746, %v1359
        %v1776 = vmul.f32 %v1748, %v1360
        %v1777 = vmul.f32 %v1750, %v1361
        %v1778 = vmul.f32 %v1752, %v1362
        %v1779 = vmul.f32 %v1754, %v1363
        %v1780 = vmul.f32 %v1756, %v1364
        %v1781 = vmul.f32 %v1758, %v1365
        %v1782 = vmul.f32 %v1760, %v1366
        %v1783 = vmul.f32 %v1762, %v1367
        %v1784 = vmul.f32 %v1764, %v1368
        %v1785 = vmul.f32 %v1766, %v1369
        %v1786 = vmul.f32 %v1768, %v1370
        %v1787 = vmul.f32 %v1770, %v1371
        %v1788 = vmul.f32 %v1772, %v1372
        %v1789 = vadd.f32 %v1725, %v1773
        %v1790 = vadd.f32 %v1726, %v1774
        %v1791 = vadd.f32 %v1727, %v1775
        %v1792 = vadd.f32 %v1728, %v1776
        %v1793 = vadd.f32 %v1729, %v1777
        %v1794 = vadd.f32 %v1730, %v1778
        %v1795 = vadd.f32 %v1731, %v1779
        %v1796 = vadd.f32 %v1732, %v1780
        %v1797 = vadd.f32 %v1733, %v1781
        %v1798 = vadd.f32 %v1734, %v1782
        %v1799 = vadd.f32 %v1735, %v1783
        %v1800 = vadd.f32 %v1736, %v1784
        %v1801 = vadd.f32 %v1737, %v1785
        %v1802 = vadd.f32 %v1738, %v1786
        %v1803 = vadd.f32 %v1739, %v1787
        %v1804 = vadd.f32 %v1740, %v1788
        %v1805 = vpack.c.bf16 %v1790, %v1789
        %v1806 = vpack.c.bf16 %v1792, %v1791
        %v1807 = vpack.c.bf16 %v1794, %v1793
        %v1808 = vpack.c.bf16 %v1796, %v1795
        %v1809 = vpack.c.bf16 %v1798, %v1797
        %v1810 = vpack.c.bf16 %v1800, %v1799
        %v1811 = vpack.c.bf16 %v1802, %v1801
        %v1812 = vpack.c.bf16 %v1804, %v1803
        %v1821 = vunpack.c.l.b16 %v1805
        %v1822 = vunpack.c.h.b16 %v1805
        %v1823 = vunpack.c.l.b16 %v1806
        %v1824 = vunpack.c.h.b16 %v1806
        %v1825 = vunpack.c.l.b16 %v1807
        %v1826 = vunpack.c.h.b16 %v1807
        %v1827 = vunpack.c.l.b16 %v1808
        %v1828 = vunpack.c.h.b16 %v1808
        %v1829 = vunpack.c.l.b16 %v1809
        %v1830 = vunpack.c.h.b16 %v1809
        %v1831 = vunpack.c.l.b16 %v1810
        %v1832 = vunpack.c.h.b16 %v1810
        %v1833 = vunpack.c.l.b16 %v1811
        %v1834 = vunpack.c.h.b16 %v1811
        %v1835 = vunpack.c.l.b16 %v1812
        %v1836 = vunpack.c.h.b16 %v1812
        %v1837 = vpack.c.b16 %v1821, %v1821
        %v1838 = vpack.c.b16 %v1822, %v1822
        %v1839 = vpack.c.b16 %v1823, %v1823
        %v1840 = vpack.c.b16 %v1824, %v1824
        %v1841 = vpack.c.b16 %v1825, %v1825
        %v1842 = vpack.c.b16 %v1826, %v1826
        %v1843 = vpack.c.b16 %v1827, %v1827
        %v1844 = vpack.c.b16 %v1828, %v1828
        %v1845 = vpack.c.b16 %v1829, %v1829
        %v1846 = vpack.c.b16 %v1830, %v1830
        %v1847 = vpack.c.b16 %v1831, %v1831
        %v1848 = vpack.c.b16 %v1832, %v1832
        %v1849 = vpack.c.b16 %v1833, %v1833
        %v1850 = vpack.c.b16 %v1834, %v1834
        %v1851 = vpack.c.b16 %v1835, %v1835
        %v1852 = vpack.c.b16 %v1836, %v1836
        %1869 = vst [vmem:[%s475] sm:$0xf] %v1837
        %1870 = vst [vmem:[%s475 + $0x4] sm:$0xf] %v1838
        %1871 = vst [vmem:[%s475 + $0x8] sm:$0xf] %v1839
        %1872 = vst [vmem:[%s475 + $0xc] sm:$0xf] %v1840
        %1873 = vst [vmem:[%s475 + $0x10] sm:$0xf] %v1841
        %1874 = vst [vmem:[%s475 + $0x14] sm:$0xf] %v1842
        %1875 = vst [vmem:[%s475 + $0x18] sm:$0xf] %v1843
        %1876 = vst [vmem:[%s475 + $0x1c] sm:$0xf] %v1844
        %1877 = vst [vmem:[%s475 + $0x20] sm:$0xf] %v1845
        %1878 = vst [vmem:[%s475 + $0x24] sm:$0xf] %v1846
        %1879 = vst [vmem:[%s475 + $0x28] sm:$0xf] %v1847
        %1880 = vst [vmem:[%s475 + $0x2c] sm:$0xf] %v1848
        %1881 = vst [vmem:[%s475 + $0x30] sm:$0xf] %v1849
        %1882 = vst [vmem:[%s475 + $0x34] sm:$0xf] %v1850
        %1883 = vst [vmem:[%s475 + $0x38] sm:$0xf] %v1851
        %1884 = vst [vmem:[%s475 + $0x3c] sm:$0xf] %v1852
        %v1885 = vpack.c.bf16 %v1282, %v1279
        %v1886 = vpack.c.bf16 %v1290, %v1287
        %v1887 = vpack.c.bf16 %v1298, %v1295
        %v1888 = vpack.c.bf16 %v1306, %v1303
        %v1889 = vpack.c.bf16 %v1314, %v1311
        %v1890 = vpack.c.bf16 %v1322, %v1319
        %v1891 = vpack.c.bf16 %v1330, %v1327
        %v1892 = vpack.c.bf16 %v1338, %v1335
        %v1901 = vunpack.c.l.b16 %v1885
        %v1902 = vunpack.c.h.b16 %v1885
        %v1903 = vunpack.c.l.b16 %v1886
        %v1904 = vunpack.c.h.b16 %v1886
        %v1905 = vunpack.c.l.b16 %v1887
        %v1906 = vunpack.c.h.b16 %v1887
        %v1907 = vunpack.c.l.b16 %v1888
        %v1908 = vunpack.c.h.b16 %v1888
        %v1909 = vunpack.c.l.b16 %v1889
        %v1910 = vunpack.c.h.b16 %v1889
        %v1911 = vunpack.c.l.b16 %v1890
        %v1912 = vunpack.c.h.b16 %v1890
        %v1913 = vunpack.c.l.b16 %v1891
        %v1914 = vunpack.c.h.b16 %v1891
        %v1915 = vunpack.c.l.b16 %v1892
        %v1916 = vunpack.c.h.b16 %v1892
        %v1917 = vpack.c.b16 %v1901, %v1901
        %v1918 = vpack.c.b16 %v1902, %v1902
        %v1919 = vpack.c.b16 %v1903, %v1903
        %v1920 = vpack.c.b16 %v1904, %v1904
        %v1921 = vpack.c.b16 %v1905, %v1905
        %v1922 = vpack.c.b16 %v1906, %v1906
        %v1923 = vpack.c.b16 %v1907, %v1907
        %v1924 = vpack.c.b16 %v1908, %v1908
        %v1925 = vpack.c.b16 %v1909, %v1909
        %v1926 = vpack.c.b16 %v1910, %v1910
        %v1927 = vpack.c.b16 %v1911, %v1911
        %v1928 = vpack.c.b16 %v1912, %v1912
        %v1929 = vpack.c.b16 %v1913, %v1913
        %v1930 = vpack.c.b16 %v1914, %v1914
        %v1931 = vpack.c.b16 %v1915, %v1915
        %v1932 = vpack.c.b16 %v1916, %v1916
        %1949 = vst [vmem:[%s482] sm:$0xf] %v1917
        %1950 = vst [vmem:[%s482 + $0x4] sm:$0xf] %v1918
        %1951 = vst [vmem:[%s482 + $0x8] sm:$0xf] %v1919
        %1952 = vst [vmem:[%s482 + $0xc] sm:$0xf] %v1920
        %1953 = vst [vmem:[%s482 + $0x10] sm:$0xf] %v1921
        %1954 = vst [vmem:[%s482 + $0x14] sm:$0xf] %v1922
        %1955 = vst [vmem:[%s482 + $0x18] sm:$0xf] %v1923
        %1956 = vst [vmem:[%s482 + $0x1c] sm:$0xf] %v1924
        %1957 = vst [vmem:[%s482 + $0x20] sm:$0xf] %v1925
        %1958 = vst [vmem:[%s482 + $0x24] sm:$0xf] %v1926
        %1959 = vst [vmem:[%s482 + $0x28] sm:$0xf] %v1927
        %1960 = vst [vmem:[%s482 + $0x2c] sm:$0xf] %v1928
        %1961 = vst [vmem:[%s482 + $0x30] sm:$0xf] %v1929
        %1962 = vst [vmem:[%s482 + $0x34] sm:$0xf] %v1930
        %1963 = vst [vmem:[%s482 + $0x38] sm:$0xf] %v1931
        %1964 = vst [vmem:[%s482 + $0x3c] sm:$0xf] %v1932
        %s1965 = sand.u32 %s196, 1
        %s1966 = scalar_lea.sflag [#allocation4], %s1965
        %s1967 = sand.u32 %s196, 1
        %s1968 = smul.addr %s1967, 128
        %s1969 = scalar_lea.vmem [#allocation12], %s1968
        %s1970 = sand.u32 %s31, 1
        %s1971 = scalar_lea.sflag [#allocation14], %s1970
        %s1972 = sand.u32 %s224, 1
        %s1973 = smul.addr %s1972, 64
        %s1974 = scalar_lea.vmem [#allocation13], %s1973
        %s1975 = sand.u32 %s31, 1
        %s1976 = scalar_lea.sflag [#allocation14], %s1975
        %s1977 = sand.u32 %s252, 1
        %s1978 = smul.addr %s1977, 64
        %s1979 = scalar_lea.vmem [#allocation15], %s1978
        // Predicated region
        $region69: #{tpu_custom_call.1} parent=43 // pred_check
          %p1980 = pneg %p206
        $region70: #{tpu_custom_call.1} parent=43 // pred_check_branch
          %1982 = sbr.rel (%p1980) target = $region72
        $region71: #{tpu_custom_call.1} parent=43 // pred_region
          %s1983 = smul.u32 16, %s36
          %s1985 = ssub.s32 2048, 2048
          %1986 = vsyncadd %s1966, %s1985
          %s1987 = smul.addr %s1983, 2
          %s1988 = smul.addr %s35, 64
          %s1989 = sadd.s32 %s1987, %s1988
          %s1990 = smul.addr %s1989, 64
          %s1991 = scalar_lea.hbm %s6, %s1990
          %s1992 = sshll.u32 %s1969, 4
          %s1993 = int_to_ptr.vmem [resolvable:$true] %s1992
          %1998 = dma.vmem_to_hbm [thread:$0]  %s1993, 2048, %s1991, %s1966, 128, 128, 8
        $region72: #{tpu_custom_call.1} parent=43 // pred_fallthru
          _
        // Predicated region
        $region73: #{tpu_custom_call.1} parent=43 // pred_check
          %p1999 = pneg %p234
        $region74: #{tpu_custom_call.1} parent=43 // pred_check_branch
          %2001 = sbr.rel (%p1999) target = $region76
        $region75: #{tpu_custom_call.1} parent=43 // pred_region
          %s2002 = smul.u32 16, %s36
          %s2004 = ssub.s32 1024, 1024
          %2005 = vsyncadd %s1971, %s2004
          %s2006 = smul.addr %s35, 32
          %s2007 = sadd.s32 %s2002, %s2006
          %s2008 = smul.addr %s2007, 64
          %s2009 = scalar_lea.hbm %s7, %s2008
          %s2010 = sshll.u32 %s1974, 4
          %s2011 = int_to_ptr.vmem [resolvable:$true] %s2010
          %2016 = dma.vmem_to_hbm [thread:$0]  %s2011, 1024, %s2009, %s1971, 64, 64, 4
        $region76: #{tpu_custom_call.1} parent=43 // pred_fallthru
          _
        // Predicated region
        $region77: #{tpu_custom_call.1} parent=43 // pred_check
          %p2017 = pneg %p262
        $region78: #{tpu_custom_call.1} parent=43 // pred_check_branch
          %2019 = sbr.rel (%p2017) target = $region80
        $region79: #{tpu_custom_call.1} parent=43 // pred_region
          %s2020 = smul.u32 16, %s36
          %s2022 = ssub.s32 1024, 1024
          %2023 = vsyncadd %s1976, %s2022
          %s2024 = smul.addr %s35, 32
          %s2025 = sadd.s32 %s2020, %s2024
          %s2026 = smul.addr %s2025, 64
          %s2027 = scalar_lea.hbm %s8, %s2026
          %s2028 = sshll.u32 %s1979, 4
          %s2029 = int_to_ptr.vmem [resolvable:$true] %s2028
          %2034 = dma.vmem_to_hbm [thread:$0]  %s2029, 1024, %s2027, %s1976, 64, 64, 4
        $region80: #{tpu_custom_call.1} parent=43 // pred_fallthru
          _
      $region44: #{tpu_custom_call.1} parent=5 // pred_fallthru
        _
      %p2035 = scmp.le.s32.totalorder 2, %s26
      // Predicated region
      $region81: #{tpu_custom_call.1} parent=5 // pred_check
        %p2036 = pneg %p2035
      $region82: #{tpu_custom_call.1} parent=5 // pred_check_branch
        %2038 = sbr.rel (%p2036) target = $region84
      $region83: #{tpu_custom_call.1} parent=5 // pred_region
        %s2039 = ssub.s32 %s26, 2
        // Predicated region
        $region85: #{tpu_custom_call.1} parent=83 // pred_check
          %p2040 = pneg %p212
        $region86: #{tpu_custom_call.1} parent=83 // pred_check_branch
          %2042 = sbr.rel (%p2040) target = $region88
        $region87: #{tpu_custom_call.1} parent=83 // pred_region
          %s2043 = sand.u32 %s197, 1
          %s2044 = scalar_lea.sflag [#allocation4], %s2043
          %s2045 = sand.u32 %s197, 1
          %s2046 = smul.addr %s2045, 128
          %s2047 = scalar_lea.vmem [#allocation12], %s2046
          %2048 = dma.done %s2044, 2048
        $region88: #{tpu_custom_call.1} parent=83 // pred_fallthru
          _
        // Predicated region
        $region89: #{tpu_custom_call.1} parent=83 // pred_check
          %p2049 = pneg %p240
        $region90: #{tpu_custom_call.1} parent=83 // pred_check_branch
          %2051 = sbr.rel (%p2049) target = $region92
        $region91: #{tpu_custom_call.1} parent=83 // pred_region
          %s2052 = sand.u32 %s32, 1
          %s2053 = scalar_lea.sflag [#allocation14], %s2052
          %s2054 = sand.u32 %s225, 1
          %s2055 = smul.addr %s2054, 64
          %s2056 = scalar_lea.vmem [#allocation13], %s2055
          %2057 = dma.done %s2053, 1024
        $region92: #{tpu_custom_call.1} parent=83 // pred_fallthru
          _
        // Predicated region
        $region93: #{tpu_custom_call.1} parent=83 // pred_check
          %p2058 = pneg %p268
        $region94: #{tpu_custom_call.1} parent=83 // pred_check_branch
          %2060 = sbr.rel (%p2058) target = $region96
        $region95: #{tpu_custom_call.1} parent=83 // pred_region
          %s2061 = sand.u32 %s32, 1
          %s2062 = scalar_lea.sflag [#allocation14], %s2061
          %s2063 = sand.u32 %s253, 1
          %s2064 = smul.addr %s2063, 64
          %s2065 = scalar_lea.vmem [#allocation15], %s2064
          %2066 = dma.done %s2062, 1024
        $region96: #{tpu_custom_call.1} parent=83 // pred_fallthru
          _
      $region84: #{tpu_custom_call.1} parent=5 // pred_fallthru
        _
    $region6: #{tpu_custom_call.1} parent=1 // loop_footer
      %s30 = sadd.s32 1, %s26
    $region7: #{tpu_custom_call.1} parent=1 // loop_footer_branch
      %25 = sbr.rel target = $region3
    $region8: #{tpu_custom_call.1} parent=1 // loop_exit
      _
    %2067 = vsyncpa [#allocation3], 1
    %s2068 = scalar_lea.sflag [#allocation3], 1
    %2069 = vsyncpa %s2068, 1
    %2070 = vsyncpa [#allocation6], 1
    %2071 = vsyncpa [#allocation9], 1
    %2072 = vsyncpa [#allocation4], 1
    %s2073 = scalar_lea.sflag [#allocation4], 1
    %2074 = vsyncpa %s2073, 1
    %2075 = vsyncpa [#allocation14], 1
    %s2076 = scalar_lea.sflag [#allocation14], 1
    %2077 = vsyncpa %s2076, 1

</llo_original>
